<compile_context>
chip_gen: v5e
topology: v5e:2x2
jax: 0.10.0
libtpu: 0.0.40
codegen_flags: <defaults>
</compile_context>

<pallas_src>
import math

import jax
import jax.numpy as jnp
import numpy as np
from jax import lax
from jax.experimental import pallas as pl
from jax.experimental.pallas import tpu as pltpu


def _make_kernel(*, bt, l_pad, seg, left, right, k_conv, d_inner, d_half,
                 d_state, dt_rank, chunk):
    n_chunks = l_pad // chunk

    def kernel(hid_ref, w_in_ref, w_conv_ref, w_xp_ref, w_dt_ref, b_dt_ref,
               a_t_ref, d_ref, w_out_ref, out_ref,
               pad_sc, delta_sc, du_sc, b_sc, c_sc, y_sc):
        # ---- in_proj (bias=False): ONE fused bf16 matmul over the (bt*l_pad) slab ----
        xz = jnp.dot(hid_ref[...], w_in_ref[...],
                     preferred_element_type=jnp.float32)            # (M, d_inner) f32

        # ---- depthwise conv1d ('same', K taps) + SiLU, x & z branches fused ----
        # Each batch element owns a sublane-aligned zero-padded segment of pad_sc.
        # Pad rows are re-zeroed every program (<=3 rows/batch); a program_id==0
        # one-shot init is not safe when the grid axis is split across cores.
        # (conv bias is disabled in the reference module: bias=conv_bias // 2 == 0)
        w_conv = w_conv_ref[...]                                     # (K, d_inner)
        acts = []
        for b in range(bt):
            pbase = b * seg
            if left > 0:
                pad_sc[pbase:pbase + left, :] = jnp.zeros((left, d_inner), jnp.float32)
            if right > 0:
                pad_sc[pbase + left + l_pad:pbase + left + l_pad + right, :] = (
                    jnp.zeros((right, d_inner), jnp.float32))
            pad_sc[pbase + left:pbase + left + l_pad, :] = xz[b * l_pad:(b + 1) * l_pad, :]
            acc = jnp.zeros((l_pad, d_inner), jnp.float32)
            for j in range(k_conv):                                  # static taps
                acc = acc + w_conv[j:j + 1, :] * pad_sc[pbase + j:pbase + j + l_pad, :]
            acts.append(acc)
        pre = acts[0] if bt == 1 else jnp.concatenate(acts, axis=0)  # (M, d_inner)
        act = pre * jax.nn.sigmoid(pre)                              # SiLU
        u = act[:, :d_half]                                          # conv_x branch
        z_act = act[:, d_half:]                                      # conv_z (gate) branch
        # TODO(synk): roll-based conv (pltpu.roll + boundary select) would drop the
        #             pad_sc round trip; only worth it if ld/st slots saturate here.

        # ---- x_proj: ONE fused bf16 matmul, lane-dense 128-wide output ----
        x_dbl = jnp.dot(u.astype(jnp.bfloat16), w_xp_ref[...],
                        preferred_element_type=jnp.float32)          # (M, xp_pad)
        dt_in = x_dbl[:, :dt_rank]
        b_sc[...] = x_dbl[:, dt_rank:dt_rank + d_state]
        c_sc[...] = x_dbl[:, dt_rank + d_state:dt_rank + 2 * d_state]
        # TODO(synk): stage B/C pre-transposed as (d_state, M) to remove the per-chunk
        #             lane->sublane relayout below (needs a Mosaic-friendly transpose).

        # dt_proj applies its bias (nn.Linear) and selective_scan adds delta_bias
        # (= dt_proj.bias) again -- faithful to MambaVisionMixer.forward, hence 2x.
        delta = jnp.dot(dt_in.astype(jnp.bfloat16), w_dt_ref[...],
                        preferred_element_type=jnp.float32)          # (M, d_half)
        delta = jax.nn.softplus(delta + 2.0 * b_dt_ref[...])
        delta_sc[...] = delta
        du_sc[...] = delta * u

        a_t = a_t_ref[...]                                           # (d_state, d_half)

        # ---- selective scan: per-batch chunked recurrence, per-timestep temporaries ----
        # State h = (d_state, d_half) stays in vregs; da/dbu are built per timestep so
        # the live set is ~3 tiles (no chunk-wide 3-D temporaries -> no vreg spills).
        # TODO(synk): for very large d_half additionally block the scan over d_half
        #             columns; not needed at MambaVision sizes.
        # TODO(synk): on v6e/v7x exp(delta*A) could run in bf16 on the EUP (~2x);
        #             kept f32 so the same kernel stays exact on v5e.
        for b in range(bt):
            row0 = b * l_pad

            def chunk_body(c, h, _row0=row0):
                base = pl.multiple_of(_row0 + c * chunk, chunk)
                delta_c = delta_sc[pl.ds(base, chunk), :]            # (chunk, d_half)
                du_c = du_sc[pl.ds(base, chunk), :]                  # (chunk, d_half)
                b_col = b_sc[pl.ds(base, chunk), :][:, :, None]      # (chunk, d_state, 1)
                c_col = c_sc[pl.ds(base, chunk), :][:, :, None]      # (chunk, d_state, 1)
                for t in range(chunk):                               # static unroll
                    da_t = jnp.exp(delta_c[t:t + 1, :] * a_t)        # (d_state, d_half)
                    dbu_t = du_c[t:t + 1, :] * b_col[t]              # (d_state, d_half)
                    h = da_t * h + dbu_t
                    y_sc[pl.ds(base + t, 1), :] = jnp.sum(h * c_col[t], axis=0,
                                                          keepdims=True)
                return h

            h0 = jnp.zeros((d_state, d_half), jnp.float32)
            lax.fori_loop(0, n_chunks, chunk_body, h0)

        # ---- epilogue: skip term, gate branch, out_proj as two bf16 matmuls ----
        y = y_sc[...] + d_ref[...] * u                               # (M, d_half)
        w_out = w_out_ref[...]                                       # (d_inner, dm_pad)
        out = jnp.dot(y.astype(jnp.bfloat16), w_out[:d_half, :],
                      preferred_element_type=jnp.float32)
        out = out + jnp.dot(z_act.astype(jnp.bfloat16), w_out[d_half:, :],
                            preferred_element_type=jnp.float32)
        out_ref[...] = out.astype(out_ref.dtype)                     # lane-dense store

    return kernel


def mamba_vision_mixer(hidden, params, *, d_state, d_conv, dt_rank, bt_max=8):
    """Pallas forward for MambaVisionMixer.  hidden: (B, L, d_model) float32."""
    B, L, d_model = hidden.shape
    d_inner = params['W_in'].shape[0]
    d_half = d_inner // 2
    xp_out = dt_rank + 2 * d_state

    # --- wrapper-side padding so every kernel tile is (8, 128)-friendly ---
    l_pad = -(-L // 8) * 8                       # sequence rows -> multiple of 8
    dm_pad = -(-d_model // 128) * 128            # model channels -> multiple of 128
    xp_pad = -(-xp_out // 128) * 128             # fused x_proj width -> lane dense
    bt = max(1, min(bt_max, B))                  # batch elements fused per grid step
    b_pad = -(-B // bt) * bt
    grid = (b_pad // bt,)
    m_blk = bt * l_pad

    left = (d_conv - 1) // 2                     # torch padding='same': 1 left / 2 right
    right = d_conv - 1 - left
    seg = l_pad + -(-(d_conv - 1) // 8) * 8      # aligned per-batch conv segment stride
    chunk = 8

    # --- parameter plumbing (glue): pre-pad / transpose / cast weights ---
    hid = jnp.pad(hidden, ((0, b_pad - B), (0, l_pad - L), (0, dm_pad - d_model)))
    hid2d = hid.reshape(b_pad * l_pad, dm_pad).astype(jnp.bfloat16)

    w_in_t = jnp.pad(params['W_in'].T,
                     ((0, dm_pad - d_model), (0, 0))).astype(jnp.bfloat16)
    w_conv = jnp.concatenate([params['wx_conv'].T, params['wz_conv'].T],
                             axis=1).astype(jnp.float32)             # (K, d_inner)
    w_xp_t = jnp.pad(params['W_xp'].T,
                     ((0, 0), (0, xp_pad - xp_out))).astype(jnp.bfloat16)
    w_dt_t = params['W_dt'].T.astype(jnp.bfloat16)                   # (dt_rank, d_half)
    b_dt = params['b_dt'][None, :].astype(jnp.float32)               # (1, d_half)
    a_t = (-jnp.exp(params['A_log'])).T.astype(jnp.float32)          # (d_state, d_half)
    d_row = params['D'][None, :].astype(jnp.float32)                 # (1, d_half)
    w_out_t = jnp.pad(params['W_out'].T,
                      ((0, 0), (0, dm_pad - d_model))).astype(jnp.bfloat16)

    weights = (w_in_t, w_conv, w_xp_t, w_dt_t, b_dt, a_t, d_row, w_out_t)

    def full_spec(arr):
        nd = arr.ndim
        # TODO(synk): mark constant-index weight specs pipeline_mode=pl.Buffered(1)
        #             once Bt is raised against the v7x 64 MiB VMEM cap.
        return pl.BlockSpec(arr.shape, lambda g, _nd=nd: (0,) * _nd)

    in_specs = [pl.BlockSpec((m_blk, dm_pad), lambda g: (g, 0))]
    in_specs += [full_spec(a) for a in weights]
    out_specs = pl.BlockSpec((m_blk, dm_pad), lambda g: (g, 0))

    scratch_shapes = [
        pltpu.VMEM((bt * seg, d_inner), jnp.float32),   # zero-padded conv input
        pltpu.VMEM((m_blk, d_half), jnp.float32),       # delta
        pltpu.VMEM((m_blk, d_half), jnp.float32),       # delta * u
        pltpu.VMEM((m_blk, d_state), jnp.float32),      # B
        pltpu.VMEM((m_blk, d_state), jnp.float32),      # C
        pltpu.VMEM((m_blk, d_half), jnp.float32),       # y (ssm output)
    ]
    scratch_bytes = 4 * (bt * seg * d_inner + 3 * m_blk * d_half + 2 * m_blk * d_state)

    # Rough VMEM budget: pipelined in/out blocks + resident weights + scratch +
    # headroom for spilled (M, d_inner) intermediates; clamped to [32, 64] MiB so the
    # limit is valid on every generation (v7x physical VMEM = 64 MiB per core).
    est = (2 * m_blk * dm_pad * 2 + 2 * m_blk * dm_pad * 4
           + 2 * sum(int(w.size) * w.dtype.itemsize for w in weights)
           + scratch_bytes
           + 6 * m_blk * d_inner * 4)
    vmem_limit = int(min(max(est, 32 * 1024 * 1024), 64 * 1024 * 1024))

    kernel = _make_kernel(bt=bt, l_pad=l_pad, seg=seg, left=left, right=right,
                          k_conv=d_conv, d_inner=d_inner, d_half=d_half,
                          d_state=d_state, dt_rank=dt_rank, chunk=chunk)

    out2d = pl.pallas_call(
        kernel,
        out_shape=jax.ShapeDtypeStruct((b_pad * l_pad, dm_pad), jnp.float32),
        grid=grid,
        in_specs=in_specs,
        out_specs=out_specs,
        scratch_shapes=scratch_shapes,
        compiler_params=pltpu.CompilerParams(
            dimension_semantics=("parallel",),
            vmem_limit_bytes=vmem_limit),
    )(hid2d, *weights)

    out = out2d.reshape(b_pad, l_pad, dm_pad)
    return out[:B, :L, :d_model]


def reference_forward(hidden, p, *, d_state, d_conv, dt_rank):
    """Pure-JAX (f32) reference implementing the same math for validation."""
    B, L, d_model = hidden.shape
    d_half = p['W_in'].shape[0] // 2
    left = (d_conv - 1) // 2
    right = d_conv - 1 - left

    xz = jnp.einsum('bld,ed->ble', hidden, p['W_in'])
    x = xz[..., :d_half]
    z = xz[..., d_half:]

    def dwconv(seq, w):                      # seq (B,L,C), w (C,K); torch 'same' pad
        pad = jnp.pad(seq, ((0, 0), (left, right), (0, 0)))
        out = jnp.zeros_like(seq)
        for j in range(d_conv):
            out = out + w[:, j] * pad[:, j:j + L, :]
        return out

    x = jax.nn.silu(dwconv(x, p['wx_conv']))
    z = jax.nn.silu(dwconv(z, p['wz_conv']))

    x_dbl = jnp.einsum('blc,ec->ble', x, p['W_xp'])
    dt = x_dbl[..., :dt_rank]
    Bm = x_dbl[..., dt_rank:dt_rank + d_state]
    Cm = x_dbl[..., dt_rank + d_state:]
    delta = jax.nn.softplus(jnp.einsum('blr,cr->blc', dt, p['W_dt']) + 2.0 * p['b_dt'])
    A = -jnp.exp(p['A_log'])                                   # (d_half, d_state)

    h = jnp.zeros((B, d_half, d_state), jnp.float32)
    ys = []
    for t in range(L):
        dA = jnp.exp(delta[:, t, :, None] * A[None])
        dBu = (delta[:, t, :, None] * x[:, t, :, None]) * Bm[:, t, None, :]
        h = dA * h + dBu
        ys.append(jnp.einsum('bdn,bn->bd', h, Cm[:, t]))
    y = jnp.stack(ys, axis=1) + p['D'] * x
    ycat = jnp.concatenate([y, z], axis=-1)
    return jnp.einsum('ble,oe->blo', ycat, p['W_out'])


if __name__ == "__main__":
    d_model, d_state, d_conv, expand = 32, 16, 4, 2
    d_inner = expand * d_model
    d_half = d_inner // 2
    dt_rank = math.ceil(d_model / 16)
    dt_min, dt_max, dt_init_floor = 0.001, 0.1, 1e-4
    B, L = 2, 14      # L not a multiple of 8 and d_model < 128: exercises both pads

    key = jax.random.PRNGKey(0)
    ks = jax.random.split(key, 9)

    def unif(k, shape, s):
        return jax.random.uniform(k, shape, jnp.float32, -s, s)

    params = {
        'W_in': unif(ks[0], (d_inner, d_model), 1.0 / math.sqrt(d_model)),
        'W_xp': unif(ks[1], (dt_rank + 2 * d_state, d_half), 1.0 / math.sqrt(d_half)),
        'W_dt': unif(ks[2], (d_half, dt_rank), dt_rank ** -0.5),
        'W_out': unif(ks[3], (d_model, d_inner), 1.0 / math.sqrt(d_inner)),
        'wx_conv': unif(ks[4], (d_half, d_conv), 1.0 / math.sqrt(d_conv)),
        'wz_conv': unif(ks[5], (d_half, d_conv), 1.0 / math.sqrt(d_conv)),
        'A_log': jnp.log(jnp.tile(jnp.arange(1, d_state + 1, dtype=jnp.float32)[None, :],
                                  (d_half, 1))),
        'D': jnp.ones((d_half,), jnp.float32),
    }
    dt0 = jnp.exp(jax.random.uniform(ks[6], (d_half,), jnp.float32)
                  * (math.log(dt_max) - math.log(dt_min)) + math.log(dt_min))
    dt0 = jnp.maximum(dt0, dt_init_floor)
    params['b_dt'] = dt0 + jnp.log(-jnp.expm1(-dt0))            # inv-softplus init

    hidden = jax.random.normal(ks[7], (B, L, d_model), jnp.float32)

    out = mamba_vision_mixer(hidden, params, d_state=d_state, d_conv=d_conv,
                             dt_rank=dt_rank)
    out = jax.block_until_ready(out)

    ref = reference_forward(hidden, params, d_state=d_state, d_conv=d_conv,
                            dt_rank=dt_rank)
    np.testing.assert_allclose(np.asarray(out), np.asarray(ref), rtol=2e-2, atol=2e-2)
    print("KERNEL_OK")
</pallas_src>

<mosaic_0001>
module attributes {stable_mosaic.version = 11 : i64} {
  func.func @kernel(%arg0: i32, %arg1: memref<32x128xbf16, #tpu.memory_space<vmem>>, %arg2: memref<128x64xbf16, #tpu.memory_space<vmem>>, %arg3: memref<4x64xf32, #tpu.memory_space<vmem>>, %arg4: memref<32x128xbf16, #tpu.memory_space<vmem>>, %arg5: memref<2x32xbf16, #tpu.memory_space<vmem>>, %arg6: memref<1x32xf32, #tpu.memory_space<vmem>>, %arg7: memref<16x32xf32, #tpu.memory_space<vmem>>, %arg8: memref<1x32xf32, #tpu.memory_space<vmem>>, %arg9: memref<64x128xbf16, #tpu.memory_space<vmem>>, %arg10: memref<32x128xf32, #tpu.memory_space<vmem>>, %arg11: memref<48x64xf32, #tpu.memory_space<vmem>>, %arg12: memref<32x32xf32, #tpu.memory_space<vmem>>, %arg13: memref<32x32xf32, #tpu.memory_space<vmem>>, %arg14: memref<32x16xf32, #tpu.memory_space<vmem>>, %arg15: memref<32x16xf32, #tpu.memory_space<vmem>>, %arg16: memref<32x32xf32, #tpu.memory_space<vmem>>) attributes {dimension_semantics = [#tpu.dimension_semantics<parallel>], iteration_bounds = array<i64: 1>, scalar_prefetch = 0 : i64, scratch_operands = 6 : i64, tpu.core_type = #tpu.core_type<tc>, window_params = [{transform_indices = @transform_0, window_bounds = array<i64: 32, 128>}, {pipeline_mode = #tpu.pipeline_mode<synchronous>, transform_indices = @transform_1, window_bounds = array<i64: 128, 64>}, {pipeline_mode = #tpu.pipeline_mode<synchronous>, transform_indices = @transform_2, window_bounds = array<i64: 4, 64>}, {pipeline_mode = #tpu.pipeline_mode<synchronous>, transform_indices = @transform_3, window_bounds = array<i64: 32, 128>}, {pipeline_mode = #tpu.pipeline_mode<synchronous>, transform_indices = @transform_4, window_bounds = array<i64: 2, 32>}, {pipeline_mode = #tpu.pipeline_mode<synchronous>, transform_indices = @transform_5, window_bounds = array<i64: 1, 32>}, {pipeline_mode = #tpu.pipeline_mode<synchronous>, transform_indices = @transform_6, window_bounds = array<i64: 16, 32>}, {pipeline_mode = #tpu.pipeline_mode<synchronous>, transform_indices = @transform_7, window_bounds = array<i64: 1, 32>}, {pipeline_mode = #tpu.pipeline_mode<synchronous>, transform_indices = @transform_8, window_bounds = array<i64: 64, 128>}, {transform_indices = @transform_9, window_bounds = array<i64: 32, 128>}]} {
    %c0 = arith.constant 0 : index
    %c0_0 = arith.constant 0 : index
    %0 = vector.load %arg1[%c0, %c0_0] : memref<32x128xbf16, #tpu.memory_space<vmem>>, vector<32x128xbf16>
    %c0_1 = arith.constant 0 : index
    %c0_2 = arith.constant 0 : index
    %1 = vector.load %arg2[%c0_1, %c0_2] : memref<128x64xbf16, #tpu.memory_space<vmem>>, vector<128x64xbf16>
    %cst = arith.constant dense<0.000000e+00> : vector<32x64xf32>
    %2 = tpu.matmul %0, %1, %cst {dimension_numbers = #tpu.dot_dimension_numbers<[1], [0], [0], [1], [0, 0, 1, 1], [], []>} : vector<32x128xbf16>, vector<128x64xbf16>, vector<32x64xf32> -> vector<32x64xf32>
    %c0_3 = arith.constant 0 : index
    %c0_4 = arith.constant 0 : index
    %3 = vector.load %arg3[%c0_3, %c0_4] : memref<4x64xf32, #tpu.memory_space<vmem>>, vector<4x64xf32>
    %cst_5 = arith.constant 0.000000e+00 : f32
    %4 = vector.broadcast %cst_5 : f32 to vector<1x64xf32>
    %c0_6 = arith.constant 0 : index
    %c0_7 = arith.constant 0 : index
    %5 = vector.load %arg11[%c0_6, %c0_7] : memref<48x64xf32, #tpu.memory_space<vmem>>, vector<1x64xf32>
    tpu.vector_store %arg11[%c0_6, %c0_7], %4 {strides = array<i32>} : memref<48x64xf32, #tpu.memory_space<vmem>>, vector<1x64xf32>,
    %cst_8 = arith.constant 0.000000e+00 : f32
    %6 = vector.broadcast %cst_8 : f32 to vector<2x64xf32>
    %c17 = arith.constant 17 : index
    %c0_9 = arith.constant 0 : index
    %7 = vector.load %arg11[%c17, %c0_9] : memref<48x64xf32, #tpu.memory_space<vmem>>, vector<2x64xf32>
    tpu.vector_store %arg11[%c17, %c0_9], %6 {strides = array<i32>} : memref<48x64xf32, #tpu.memory_space<vmem>>, vector<2x64xf32>,
    %8 = vector.extract_strided_slice %2 {offsets = [0, 0], sizes = [16, 64], strides = [1, 1]} : vector<32x64xf32> to vector<16x64xf32>
    %c1 = arith.constant 1 : index
    %c0_10 = arith.constant 0 : index
    %9 = vector.load %arg11[%c1, %c0_10] : memref<48x64xf32, #tpu.memory_space<vmem>>, vector<16x64xf32>
    tpu.vector_store %arg11[%c1, %c0_10], %8 {strides = array<i32>} : memref<48x64xf32, #tpu.memory_space<vmem>>, vector<16x64xf32>,
    %cst_11 = arith.constant 0.000000e+00 : f32
    %10 = vector.broadcast %cst_11 : f32 to vector<16x64xf32>
    %11 = vector.extract_strided_slice %3 {offsets = [0, 0], sizes = [1, 64], strides = [1, 1]} : vector<4x64xf32> to vector<1x64xf32>
    %c0_12 = arith.constant 0 : index
    %c0_13 = arith.constant 0 : index
    %12 = vector.load %arg11[%c0_12, %c0_13] : memref<48x64xf32, #tpu.memory_space<vmem>>, vector<16x64xf32>
    %13 = vector.broadcast %11 : vector<1x64xf32> to vector<16x64xf32>
    %14 = arith.mulf %13, %12 : vector<16x64xf32>
    %15 = arith.addf %10, %14 : vector<16x64xf32>
    %16 = vector.extract_strided_slice %3 {offsets = [1, 0], sizes = [1, 64], strides = [1, 1]} : vector<4x64xf32> to vector<1x64xf32>
    %c1_14 = arith.constant 1 : index
    %c0_15 = arith.constant 0 : index
    %17 = vector.load %arg11[%c1_14, %c0_15] : memref<48x64xf32, #tpu.memory_space<vmem>>, vector<16x64xf32>
    %18 = vector.broadcast %16 : vector<1x64xf32> to vector<16x64xf32>
    %19 = arith.mulf %18, %17 : vector<16x64xf32>
    %20 = arith.addf %15, %19 : vector<16x64xf32>
    %21 = vector.extract_strided_slice %3 {offsets = [2, 0], sizes = [1, 64], strides = [1, 1]} : vector<4x64xf32> to vector<1x64xf32>
    %c2 = arith.constant 2 : index
    %c0_16 = arith.constant 0 : index
    %22 = vector.load %arg11[%c2, %c0_16] : memref<48x64xf32, #tpu.memory_space<vmem>>, vector<16x64xf32>
    %23 = vector.broadcast %21 : vector<1x64xf32> to vector<16x64xf32>
    %24 = arith.mulf %23, %22 : vector<16x64xf32>
    %25 = arith.addf %20, %24 : vector<16x64xf32>
    %26 = vector.extract_strided_slice %3 {offsets = [3, 0], sizes = [1, 64], strides = [1, 1]} : vector<4x64xf32> to vector<1x64xf32>
    %c3 = arith.constant 3 : index
    %c0_17 = arith.constant 0 : index
    %27 = vector.load %arg11[%c3, %c0_17] : memref<48x64xf32, #tpu.memory_space<vmem>>, vector<16x64xf32>
    %28 = vector.broadcast %26 : vector<1x64xf32> to vector<16x64xf32>
    %29 = arith.mulf %28, %27 : vector<16x64xf32>
    %30 = arith.addf %25, %29 : vector<16x64xf32>
    %cst_18 = arith.constant 0.000000e+00 : f32
    %31 = vector.broadcast %cst_18 : f32 to vector<1x64xf32>
    %c24 = arith.constant 24 : index
    %c0_19 = arith.constant 0 : index
    %32 = vector.load %arg11[%c24, %c0_19] : memref<48x64xf32, #tpu.memory_space<vmem>>, vector<1x64xf32>
    tpu.vector_store %arg11[%c24, %c0_19], %31 {strides = array<i32>} : memref<48x64xf32, #tpu.memory_space<vmem>>, vector<1x64xf32>,
    %cst_20 = arith.constant 0.000000e+00 : f32
    %33 = vector.broadcast %cst_20 : f32 to vector<2x64xf32>
    %c41 = arith.constant 41 : index
    %c0_21 = arith.constant 0 : index
    %34 = vector.load %arg11[%c41, %c0_21] : memref<48x64xf32, #tpu.memory_space<vmem>>, vector<2x64xf32>
    tpu.vector_store %arg11[%c41, %c0_21], %33 {strides = array<i32>} : memref<48x64xf32, #tpu.memory_space<vmem>>, vector<2x64xf32>,
    %35 = vector.extract_strided_slice %2 {offsets = [16, 0], sizes = [16, 64], strides = [1, 1]} : vector<32x64xf32> to vector<16x64xf32>
    %c25 = arith.constant 25 : index
    %c0_22 = arith.constant 0 : index
    %36 = vector.load %arg11[%c25, %c0_22] : memref<48x64xf32, #tpu.memory_space<vmem>>, vector<16x64xf32>
    tpu.vector_store %arg11[%c25, %c0_22], %35 {strides = array<i32>} : memref<48x64xf32, #tpu.memory_space<vmem>>, vector<16x64xf32>,
    %cst_23 = arith.constant 0.000000e+00 : f32
    %37 = vector.broadcast %cst_23 : f32 to vector<16x64xf32>
    %38 = vector.extract_strided_slice %3 {offsets = [0, 0], sizes = [1, 64], strides = [1, 1]} : vector<4x64xf32> to vector<1x64xf32>
    %c24_24 = arith.constant 24 : index
    %c0_25 = arith.constant 0 : index
    %39 = vector.load %arg11[%c24_24, %c0_25] : memref<48x64xf32, #tpu.memory_space<vmem>>, vector<16x64xf32>
    %40 = vector.broadcast %38 : vector<1x64xf32> to vector<16x64xf32>
    %41 = arith.mulf %40, %39 : vector<16x64xf32>
    %42 = arith.addf %37, %41 : vector<16x64xf32>
    %43 = vector.extract_strided_slice %3 {offsets = [1, 0], sizes = [1, 64], strides = [1, 1]} : vector<4x64xf32> to vector<1x64xf32>
    %c25_26 = arith.constant 25 : index
    %c0_27 = arith.constant 0 : index
    %44 = vector.load %arg11[%c25_26, %c0_27] : memref<48x64xf32, #tpu.memory_space<vmem>>, vector<16x64xf32>
    %45 = vector.broadcast %43 : vector<1x64xf32> to vector<16x64xf32>
    %46 = arith.mulf %45, %44 : vector<16x64xf32>
    %47 = arith.addf %42, %46 : vector<16x64xf32>
    %48 = vector.extract_strided_slice %3 {offsets = [2, 0], sizes = [1, 64], strides = [1, 1]} : vector<4x64xf32> to vector<1x64xf32>
    %c26 = arith.constant 26 : index
    %c0_28 = arith.constant 0 : index
    %49 = vector.load %arg11[%c26, %c0_28] : memref<48x64xf32, #tpu.memory_space<vmem>>, vector<16x64xf32>
    %50 = vector.broadcast %48 : vector<1x64xf32> to vector<16x64xf32>
    %51 = arith.mulf %50, %49 : vector<16x64xf32>
    %52 = arith.addf %47, %51 : vector<16x64xf32>
    %53 = vector.extract_strided_slice %3 {offsets = [3, 0], sizes = [1, 64], strides = [1, 1]} : vector<4x64xf32> to vector<1x64xf32>
    %c27 = arith.constant 27 : index
    %c0_29 = arith.constant 0 : index
    %54 = vector.load %arg11[%c27, %c0_29] : memref<48x64xf32, #tpu.memory_space<vmem>>, vector<16x64xf32>
    %55 = vector.broadcast %53 : vector<1x64xf32> to vector<16x64xf32>
    %56 = arith.mulf %55, %54 : vector<16x64xf32>
    %57 = arith.addf %52, %56 : vector<16x64xf32>
    %58 = tpu.concatenate %30, %57 in 0 : vector<16x64xf32>, vector<16x64xf32> -> vector<32x64xf32>
    %59 = arith.negf %58 : vector<32x64xf32>
    %60 = math.exp %59 : vector<32x64xf32>
    %cst_30 = arith.constant 1.000000e+00 : f32
    %61 = vector.broadcast %cst_30 : f32 to vector<32x64xf32>
    %62 = arith.addf %61, %60 : vector<32x64xf32>
    %63 = arith.divf %61, %62 : vector<32x64xf32>
    %64 = arith.mulf %58, %63 : vector<32x64xf32>
    %65 = vector.extract_strided_slice %64 {offsets = [0, 0], sizes = [32, 32], strides = [1, 1]} : vector<32x64xf32> to vector<32x32xf32>
    %66 = vector.extract_strided_slice %64 {offsets = [0, 32], sizes = [32, 32], strides = [1, 1]} : vector<32x64xf32> to vector<32x32xf32>
    %67 = arith.truncf %65 : vector<32x32xf32> to vector<32x32xbf16>
    %c0_31 = arith.constant 0 : index
    %c0_32 = arith.constant 0 : index
    %68 = vector.load %arg4[%c0_31, %c0_32] : memref<32x128xbf16, #tpu.memory_space<vmem>>, vector<32x128xbf16>
    %cst_33 = arith.constant dense<0.000000e+00> : vector<32x128xf32>
    %69 = tpu.matmul %67, %68, %cst_33 {dimension_numbers = #tpu.dot_dimension_numbers<[1], [0], [0], [1], [0, 0, 1, 1], [], []>} : vector<32x32xbf16>, vector<32x128xbf16>, vector<32x128xf32> -> vector<32x128xf32>
    %70 = vector.extract_strided_slice %69 {offsets = [0, 0], sizes = [32, 2], strides = [1, 1]} : vector<32x128xf32> to vector<32x2xf32>
    %71 = vector.extract_strided_slice %69 {offsets = [0, 2], sizes = [32, 16], strides = [1, 1]} : vector<32x128xf32> to vector<32x16xf32>
    %c0_34 = arith.constant 0 : index
    %c0_35 = arith.constant 0 : index
    %72 = vector.load %arg14[%c0_34, %c0_35] : memref<32x16xf32, #tpu.memory_space<vmem>>, vector<32x16xf32>
    tpu.vector_store %arg14[%c0_34, %c0_35], %71 {strides = array<i32>} : memref<32x16xf32, #tpu.memory_space<vmem>>, vector<32x16xf32>,
    %73 = vector.extract_strided_slice %69 {offsets = [0, 18], sizes = [32, 16], strides = [1, 1]} : vector<32x128xf32> to vector<32x16xf32>
    %c0_36 = arith.constant 0 : index
    %c0_37 = arith.constant 0 : index
    %74 = vector.load %arg15[%c0_36, %c0_37] : memref<32x16xf32, #tpu.memory_space<vmem>>, vector<32x16xf32>
    tpu.vector_store %arg15[%c0_36, %c0_37], %73 {strides = array<i32>} : memref<32x16xf32, #tpu.memory_space<vmem>>, vector<32x16xf32>,
    %75 = arith.truncf %70 : vector<32x2xf32> to vector<32x2xbf16>
    %c0_38 = arith.constant 0 : index
    %c0_39 = arith.constant 0 : index
    %76 = vector.load %arg5[%c0_38, %c0_39] : memref<2x32xbf16, #tpu.memory_space<vmem>>, vector<2x32xbf16>
    %cst_40 = arith.constant dense<0.000000e+00> : vector<32x32xf32>
    %77 = tpu.matmul %75, %76, %cst_40 {dimension_numbers = #tpu.dot_dimension_numbers<[1], [0], [0], [1], [0, 0, 1, 1], [], []>} : vector<32x2xbf16>, vector<2x32xbf16>, vector<32x32xf32> -> vector<32x32xf32>
    %c0_41 = arith.constant 0 : index
    %c0_42 = arith.constant 0 : index
    %78 = vector.load %arg6[%c0_41, %c0_42] : memref<1x32xf32, #tpu.memory_space<vmem>>, vector<1x32xf32>
    %cst_43 = arith.constant 2.000000e+00 : f32
    %79 = vector.broadcast %cst_43 : f32 to vector<1x32xf32>
    %80 = arith.mulf %79, %78 : vector<1x32xf32>
    %81 = vector.broadcast %80 : vector<1x32xf32> to vector<32x32xf32>
    %82 = arith.addf %77, %81 : vector<32x32xf32>
    %cst_44 = arith.constant 0.000000e+00 : f32
    %83 = vector.broadcast %cst_44 : f32 to vector<32x32xf32>
    %84 = arith.maximumf %82, %83 : vector<32x32xf32>
    %85 = vector.broadcast %cst_44 : f32 to vector<32x32xf32>
    %86 = arith.subf %82, %85 : vector<32x32xf32>
    %87 = arith.cmpf one, %86, %86 : vector<32x32xf32>
    %88 = vector.broadcast %cst_44 : f32 to vector<32x32xf32>
    %89 = arith.addf %82, %88 : vector<32x32xf32>
    %90 = math.absf %86 : vector<32x32xf32>
    %cst_45 = arith.constant 0.000000e+00 : f32
    %91 = vector.broadcast %cst_45 : f32 to vector<32x32xf32>
    %92 = arith.subf %91, %90 : vector<32x32xf32>
    %93 = math.exp %92 : vector<32x32xf32>
    %94 = math.log1p %93 : vector<32x32xf32>
    %95 = arith.addf %84, %94 : vector<32x32xf32>
    %96 = arith.select %87, %89, %95 : vector<32x32xi1>, vector<32x32xf32>
    %c0_46 = arith.constant 0 : index
    %c0_47 = arith.constant 0 : index
    %97 = vector.load %arg12[%c0_46, %c0_47] : memref<32x32xf32, #tpu.memory_space<vmem>>, vector<32x32xf32>
    tpu.vector_store %arg12[%c0_46, %c0_47], %96 {strides = array<i32>} : memref<32x32xf32, #tpu.memory_space<vmem>>, vector<32x32xf32>,
    %98 = arith.mulf %96, %65 : vector<32x32xf32>
    %c0_48 = arith.constant 0 : index
    %c0_49 = arith.constant 0 : index
    %99 = vector.load %arg13[%c0_48, %c0_49] : memref<32x32xf32, #tpu.memory_space<vmem>>, vector<32x32xf32>
    tpu.vector_store %arg13[%c0_48, %c0_49], %98 {strides = array<i32>} : memref<32x32xf32, #tpu.memory_space<vmem>>, vector<32x32xf32>,
    %c0_50 = arith.constant 0 : index
    %c0_51 = arith.constant 0 : index
    %100 = vector.load %arg7[%c0_50, %c0_51] : memref<16x32xf32, #tpu.memory_space<vmem>>, vector<16x32xf32>
    %cst_52 = arith.constant 0.000000e+00 : f32
    %101 = vector.broadcast %cst_52 : f32 to vector<16x32xf32>
    %c0_i32 = arith.constant 0 : i32
    %c2_i32 = arith.constant 2 : i32
    %102 = arith.addi %c0_i32, %c2_i32 : i32
    %c1_i32 = arith.constant 1 : i32
    %103 = scf.for %arg17 = %c0_i32 to %102 step %c1_i32 iter_args(%arg18 = %101) -> (vector<16x32xf32>)  : i32 {
      %c8_i32 = arith.constant 8 : i32
      %121 = arith.muli %arg17, %c8_i32 : i32
      %c0_i32_69 = arith.constant 0 : i32
      %122 = arith.addi %c0_i32_69, %121 : i32
      %123 = tpu.assume_multiple %122, 8 : i32
      %124 = arith.index_cast %123 : i32 to index
      %c0_70 = arith.constant 0 : index
      %125 = vector.load %arg12[%124, %c0_70] : memref<32x32xf32, #tpu.memory_space<vmem>>, vector<8x32xf32>
      %126 = arith.index_cast %123 : i32 to index
      %c0_71 = arith.constant 0 : index
      %127 = vector.load %arg13[%126, %c0_71] : memref<32x32xf32, #tpu.memory_space<vmem>>, vector<8x32xf32>
      %128 = arith.index_cast %123 : i32 to index
      %c0_72 = arith.constant 0 : index
      %129 = vector.load %arg14[%128, %c0_72] : memref<32x16xf32, #tpu.memory_space<vmem>>, vector<8x16xf32>
      %130 = vector.shape_cast %129 : vector<8x16xf32> to vector<8x16x1xf32>
      %131 = arith.index_cast %123 : i32 to index
      %c0_73 = arith.constant 0 : index
      %132 = vector.load %arg15[%131, %c0_73] : memref<32x16xf32, #tpu.memory_space<vmem>>, vector<8x16xf32>
      %133 = vector.shape_cast %132 : vector<8x16xf32> to vector<8x16x1xf32>
      %134 = vector.extract_strided_slice %125 {offsets = [0, 0], sizes = [1, 32], strides = [1, 1]} : vector<8x32xf32> to vector<1x32xf32>
      %135 = vector.broadcast %134 : vector<1x32xf32> to vector<16x32xf32>
      %136 = arith.mulf %135, %100 : vector<16x32xf32>
      %137 = math.exp %136 : vector<16x32xf32>
      %138 = vector.extract_strided_slice %127 {offsets = [0, 0], sizes = [1, 32], strides = [1, 1]} : vector<8x32xf32> to vector<1x32xf32>
      %139 = vector.extract_strided_slice %130 {offsets = [0, 0, 0], sizes = [1, 16, 1], strides = [1, 1, 1]} : vector<8x16x1xf32> to vector<1x16x1xf32>
      %140 = vector.shape_cast %139 : vector<1x16x1xf32> to vector<16x1xf32>
      %141 = vector.broadcast %138 : vector<1x32xf32> to vector<16x32xf32>
      %142 = vector.broadcast %140 : vector<16x1xf32> to vector<16x32xf32>
      %143 = arith.mulf %141, %142 : vector<16x32xf32>
      %144 = arith.mulf %137, %arg18 : vector<16x32xf32>
      %145 = arith.addf %144, %143 : vector<16x32xf32>
      %146 = vector.extract_strided_slice %133 {offsets = [0, 0, 0], sizes = [1, 16, 1], strides = [1, 1, 1]} : vector<8x16x1xf32> to vector<1x16x1xf32>
      %147 = vector.shape_cast %146 : vector<1x16x1xf32> to vector<16x1xf32>
      %148 = vector.broadcast %147 : vector<16x1xf32> to vector<16x32xf32>
      %149 = arith.mulf %145, %148 : vector<16x32xf32>
      %cst_74 = arith.constant dense<0.000000e+00> : vector<32xf32>
      %150 = vector.multi_reduction <add>, %149, %cst_74 [0] : vector<16x32xf32> to vector<32xf32>
      %151 = vector.shape_cast %150 : vector<32xf32> to vector<1x32xf32>
      %c0_i32_75 = arith.constant 0 : i32
      %152 = arith.addi %123, %c0_i32_75 : i32
      %153 = arith.index_cast %152 : i32 to index
      %c0_76 = arith.constant 0 : index
      %154 = vector.load %arg16[%153, %c0_76] : memref<32x32xf32, #tpu.memory_space<vmem>>, vector<1x32xf32>
      tpu.vector_store %arg16[%153, %c0_76], %151 {strides = array<i32>} : memref<32x32xf32, #tpu.memory_space<vmem>>, vector<1x32xf32>,
      %155 = vector.extract_strided_slice %125 {offsets = [1, 0], sizes = [1, 32], strides = [1, 1]} : vector<8x32xf32> to vector<1x32xf32>
      %156 = vector.broadcast %155 : vector<1x32xf32> to vector<16x32xf32>
      %157 = arith.mulf %156, %100 : vector<16x32xf32>
      %158 = math.exp %157 : vector<16x32xf32>
      %159 = vector.extract_strided_slice %127 {offsets = [1, 0], sizes = [1, 32], strides = [1, 1]} : vector<8x32xf32> to vector<1x32xf32>
      %160 = vector.extract_strided_slice %130 {offsets = [1, 0, 0], sizes = [1, 16, 1], strides = [1, 1, 1]} : vector<8x16x1xf32> to vector<1x16x1xf32>
      %161 = vector.shape_cast %160 : vector<1x16x1xf32> to vector<16x1xf32>
      %162 = vector.broadcast %159 : vector<1x32xf32> to vector<16x32xf32>
      %163 = vector.broadcast %161 : vector<16x1xf32> to vector<16x32xf32>
      %164 = arith.mulf %162, %163 : vector<16x32xf32>
      %165 = arith.mulf %158, %145 : vector<16x32xf32>
      %166 = arith.addf %165, %164 : vector<16x32xf32>
      %167 = vector.extract_strided_slice %133 {offsets = [1, 0, 0], sizes = [1, 16, 1], strides = [1, 1, 1]} : vector<8x16x1xf32> to vector<1x16x1xf32>
      %168 = vector.shape_cast %167 : vector<1x16x1xf32> to vector<16x1xf32>
      %169 = vector.broadcast %168 : vector<16x1xf32> to vector<16x32xf32>
      %170 = arith.mulf %166, %169 : vector<16x32xf32>
      %cst_77 = arith.constant dense<0.000000e+00> : vector<32xf32>
      %171 = vector.multi_reduction <add>, %170, %cst_77 [0] : vector<16x32xf32> to vector<32xf32>
      %172 = vector.shape_cast %171 : vector<32xf32> to vector<1x32xf32>
      %c1_i32_78 = arith.constant 1 : i32
      %173 = arith.addi %123, %c1_i32_78 : i32
      %174 = arith.index_cast %173 : i32 to index
      %c0_79 = arith.constant 0 : index
      %175 = vector.load %arg16[%174, %c0_79] : memref<32x32xf32, #tpu.memory_space<vmem>>, vector<1x32xf32>
      tpu.vector_store %arg16[%174, %c0_79], %172 {strides = array<i32>} : memref<32x32xf32, #tpu.memory_space<vmem>>, vector<1x32xf32>,
      %176 = vector.extract_strided_slice %125 {offsets = [2, 0], sizes = [1, 32], strides = [1, 1]} : vector<8x32xf32> to vector<1x32xf32>
      %177 = vector.broadcast %176 : vector<1x32xf32> to vector<16x32xf32>
      %178 = arith.mulf %177, %100 : vector<16x32xf32>
      %179 = math.exp %178 : vector<16x32xf32>
      %180 = vector.extract_strided_slice %127 {offsets = [2, 0], sizes = [1, 32], strides = [1, 1]} : vector<8x32xf32> to vector<1x32xf32>
      %181 = vector.extract_strided_slice %130 {offsets = [2, 0, 0], sizes = [1, 16, 1], strides = [1, 1, 1]} : vector<8x16x1xf32> to vector<1x16x1xf32>
      %182 = vector.shape_cast %181 : vector<1x16x1xf32> to vector<16x1xf32>
      %183 = vector.broadcast %180 : vector<1x32xf32> to vector<16x32xf32>
      %184 = vector.broadcast %182 : vector<16x1xf32> to vector<16x32xf32>
      %185 = arith.mulf %183, %184 : vector<16x32xf32>
      %186 = arith.mulf %179, %166 : vector<16x32xf32>
      %187 = arith.addf %186, %185 : vector<16x32xf32>
      %188 = vector.extract_strided_slice %133 {offsets = [2, 0, 0], sizes = [1, 16, 1], strides = [1, 1, 1]} : vector<8x16x1xf32> to vector<1x16x1xf32>
      %189 = vector.shape_cast %188 : vector<1x16x1xf32> to vector<16x1xf32>
      %190 = vector.broadcast %189 : vector<16x1xf32> to vector<16x32xf32>
      %191 = arith.mulf %187, %190 : vector<16x32xf32>
      %cst_80 = arith.constant dense<0.000000e+00> : vector<32xf32>
      %192 = vector.multi_reduction <add>, %191, %cst_80 [0] : vector<16x32xf32> to vector<32xf32>
      %193 = vector.shape_cast %192 : vector<32xf32> to vector<1x32xf32>
      %c2_i32_81 = arith.constant 2 : i32
      %194 = arith.addi %123, %c2_i32_81 : i32
      %195 = arith.index_cast %194 : i32 to index
      %c0_82 = arith.constant 0 : index
      %196 = vector.load %arg16[%195, %c0_82] : memref<32x32xf32, #tpu.memory_space<vmem>>, vector<1x32xf32>
      tpu.vector_store %arg16[%195, %c0_82], %193 {strides = array<i32>} : memref<32x32xf32, #tpu.memory_space<vmem>>, vector<1x32xf32>,
      %197 = vector.extract_strided_slice %125 {offsets = [3, 0], sizes = [1, 32], strides = [1, 1]} : vector<8x32xf32> to vector<1x32xf32>
      %198 = vector.broadcast %197 : vector<1x32xf32> to vector<16x32xf32>
      %199 = arith.mulf %198, %100 : vector<16x32xf32>
      %200 = math.exp %199 : vector<16x32xf32>
      %201 = vector.extract_strided_slice %127 {offsets = [3, 0], sizes = [1, 32], strides = [1, 1]} : vector<8x32xf32> to vector<1x32xf32>
      %202 = vector.extract_strided_slice %130 {offsets = [3, 0, 0], sizes = [1, 16, 1], strides = [1, 1, 1]} : vector<8x16x1xf32> to vector<1x16x1xf32>
      %203 = vector.shape_cast %202 : vector<1x16x1xf32> to vector<16x1xf32>
      %204 = vector.broadcast %201 : vector<1x32xf32> to vector<16x32xf32>
      %205 = vector.broadcast %203 : vector<16x1xf32> to vector<16x32xf32>
      %206 = arith.mulf %204, %205 : vector<16x32xf32>
      %207 = arith.mulf %200, %187 : vector<16x32xf32>
      %208 = arith.addf %207, %206 : vector<16x32xf32>
      %209 = vector.extract_strided_slice %133 {offsets = [3, 0, 0], sizes = [1, 16, 1], strides = [1, 1, 1]} : vector<8x16x1xf32> to vector<1x16x1xf32>
      %210 = vector.shape_cast %209 : vector<1x16x1xf32> to vector<16x1xf32>
      %211 = vector.broadcast %210 : vector<16x1xf32> to vector<16x32xf32>
      %212 = arith.mulf %208, %211 : vector<16x32xf32>
      %cst_83 = arith.constant dense<0.000000e+00> : vector<32xf32>
      %213 = vector.multi_reduction <add>, %212, %cst_83 [0] : vector<16x32xf32> to vector<32xf32>
      %214 = vector.shape_cast %213 : vector<32xf32> to vector<1x32xf32>
      %c3_i32 = arith.constant 3 : i32
      %215 = arith.addi %123, %c3_i32 : i32
      %216 = arith.index_cast %215 : i32 to index
      %c0_84 = arith.constant 0 : index
      %217 = vector.load %arg16[%216, %c0_84] : memref<32x32xf32, #tpu.memory_space<vmem>>, vector<1x32xf32>
      tpu.vector_store %arg16[%216, %c0_84], %214 {strides = array<i32>} : memref<32x32xf32, #tpu.memory_space<vmem>>, vector<1x32xf32>,
      %218 = vector.extract_strided_slice %125 {offsets = [4, 0], sizes = [1, 32], strides = [1, 1]} : vector<8x32xf32> to vector<1x32xf32>
      %219 = vector.broadcast %218 : vector<1x32xf32> to vector<16x32xf32>
      %220 = arith.mulf %219, %100 : vector<16x32xf32>
      %221 = math.exp %220 : vector<16x32xf32>
      %222 = vector.extract_strided_slice %127 {offsets = [4, 0], sizes = [1, 32], strides = [1, 1]} : vector<8x32xf32> to vector<1x32xf32>
      %223 = vector.extract_strided_slice %130 {offsets = [4, 0, 0], sizes = [1, 16, 1], strides = [1, 1, 1]} : vector<8x16x1xf32> to vector<1x16x1xf32>
      %224 = vector.shape_cast %223 : vector<1x16x1xf32> to vector<16x1xf32>
      %225 = vector.broadcast %222 : vector<1x32xf32> to vector<16x32xf32>
      %226 = vector.broadcast %224 : vector<16x1xf32> to vector<16x32xf32>
      %227 = arith.mulf %225, %226 : vector<16x32xf32>
      %228 = arith.mulf %221, %208 : vector<16x32xf32>
      %229 = arith.addf %228, %227 : vector<16x32xf32>
      %230 = vector.extract_strided_slice %133 {offsets = [4, 0, 0], sizes = [1, 16, 1], strides = [1, 1, 1]} : vector<8x16x1xf32> to vector<1x16x1xf32>
      %231 = vector.shape_cast %230 : vector<1x16x1xf32> to vector<16x1xf32>
      %232 = vector.broadcast %231 : vector<16x1xf32> to vector<16x32xf32>
      %233 = arith.mulf %229, %232 : vector<16x32xf32>
      %cst_85 = arith.constant dense<0.000000e+00> : vector<32xf32>
      %234 = vector.multi_reduction <add>, %233, %cst_85 [0] : vector<16x32xf32> to vector<32xf32>
      %235 = vector.shape_cast %234 : vector<32xf32> to vector<1x32xf32>
      %c4_i32 = arith.constant 4 : i32
      %236 = arith.addi %123, %c4_i32 : i32
      %237 = arith.index_cast %236 : i32 to index
      %c0_86 = arith.constant 0 : index
      %238 = vector.load %arg16[%237, %c0_86] : memref<32x32xf32, #tpu.memory_space<vmem>>, vector<1x32xf32>
      tpu.vector_store %arg16[%237, %c0_86], %235 {strides = array<i32>} : memref<32x32xf32, #tpu.memory_space<vmem>>, vector<1x32xf32>,
      %239 = vector.extract_strided_slice %125 {offsets = [5, 0], sizes = [1, 32], strides = [1, 1]} : vector<8x32xf32> to vector<1x32xf32>
      %240 = vector.broadcast %239 : vector<1x32xf32> to vector<16x32xf32>
      %241 = arith.mulf %240, %100 : vector<16x32xf32>
      %242 = math.exp %241 : vector<16x32xf32>
      %243 = vector.extract_strided_slice %127 {offsets = [5, 0], sizes = [1, 32], strides = [1, 1]} : vector<8x32xf32> to vector<1x32xf32>
      %244 = vector.extract_strided_slice %130 {offsets = [5, 0, 0], sizes = [1, 16, 1], strides = [1, 1, 1]} : vector<8x16x1xf32> to vector<1x16x1xf32>
      %245 = vector.shape_cast %244 : vector<1x16x1xf32> to vector<16x1xf32>
      %246 = vector.broadcast %243 : vector<1x32xf32> to vector<16x32xf32>
      %247 = vector.broadcast %245 : vector<16x1xf32> to vector<16x32xf32>
      %248 = arith.mulf %246, %247 : vector<16x32xf32>
      %249 = arith.mulf %242, %229 : vector<16x32xf32>
      %250 = arith.addf %249, %248 : vector<16x32xf32>
      %251 = vector.extract_strided_slice %133 {offsets = [5, 0, 0], sizes = [1, 16, 1], strides = [1, 1, 1]} : vector<8x16x1xf32> to vector<1x16x1xf32>
      %252 = vector.shape_cast %251 : vector<1x16x1xf32> to vector<16x1xf32>
      %253 = vector.broadcast %252 : vector<16x1xf32> to vector<16x32xf32>
      %254 = arith.mulf %250, %253 : vector<16x32xf32>
      %cst_87 = arith.constant dense<0.000000e+00> : vector<32xf32>
      %255 = vector.multi_reduction <add>, %254, %cst_87 [0] : vector<16x32xf32> to vector<32xf32>
      %256 = vector.shape_cast %255 : vector<32xf32> to vector<1x32xf32>
      %c5_i32 = arith.constant 5 : i32
      %257 = arith.addi %123, %c5_i32 : i32
      %258 = arith.index_cast %257 : i32 to index
      %c0_88 = arith.constant 0 : index
      %259 = vector.load %arg16[%258, %c0_88] : memref<32x32xf32, #tpu.memory_space<vmem>>, vector<1x32xf32>
      tpu.vector_store %arg16[%258, %c0_88], %256 {strides = array<i32>} : memref<32x32xf32, #tpu.memory_space<vmem>>, vector<1x32xf32>,
      %260 = vector.extract_strided_slice %125 {offsets = [6, 0], sizes = [1, 32], strides = [1, 1]} : vector<8x32xf32> to vector<1x32xf32>
      %261 = vector.broadcast %260 : vector<1x32xf32> to vector<16x32xf32>
      %262 = arith.mulf %261, %100 : vector<16x32xf32>
      %263 = math.exp %262 : vector<16x32xf32>
      %264 = vector.extract_strided_slice %127 {offsets = [6, 0], sizes = [1, 32], strides = [1, 1]} : vector<8x32xf32> to vector<1x32xf32>
      %265 = vector.extract_strided_slice %130 {offsets = [6, 0, 0], sizes = [1, 16, 1], strides = [1, 1, 1]} : vector<8x16x1xf32> to vector<1x16x1xf32>
      %266 = vector.shape_cast %265 : vector<1x16x1xf32> to vector<16x1xf32>
      %267 = vector.broadcast %264 : vector<1x32xf32> to vector<16x32xf32>
      %268 = vector.broadcast %266 : vector<16x1xf32> to vector<16x32xf32>
      %269 = arith.mulf %267, %268 : vector<16x32xf32>
      %270 = arith.mulf %263, %250 : vector<16x32xf32>
      %271 = arith.addf %270, %269 : vector<16x32xf32>
      %272 = vector.extract_strided_slice %133 {offsets = [6, 0, 0], sizes = [1, 16, 1], strides = [1, 1, 1]} : vector<8x16x1xf32> to vector<1x16x1xf32>
      %273 = vector.shape_cast %272 : vector<1x16x1xf32> to vector<16x1xf32>
      %274 = vector.broadcast %273 : vector<16x1xf32> to vector<16x32xf32>
      %275 = arith.mulf %271, %274 : vector<16x32xf32>
      %cst_89 = arith.constant dense<0.000000e+00> : vector<32xf32>
      %276 = vector.multi_reduction <add>, %275, %cst_89 [0] : vector<16x32xf32> to vector<32xf32>
      %277 = vector.shape_cast %276 : vector<32xf32> to vector<1x32xf32>
      %c6_i32 = arith.constant 6 : i32
      %278 = arith.addi %123, %c6_i32 : i32
      %279 = arith.index_cast %278 : i32 to index
      %c0_90 = arith.constant 0 : index
      %280 = vector.load %arg16[%279, %c0_90] : memref<32x32xf32, #tpu.memory_space<vmem>>, vector<1x32xf32>
      tpu.vector_store %arg16[%279, %c0_90], %277 {strides = array<i32>} : memref<32x32xf32, #tpu.memory_space<vmem>>, vector<1x32xf32>,
      %281 = vector.extract_strided_slice %125 {offsets = [7, 0], sizes = [1, 32], strides = [1, 1]} : vector<8x32xf32> to vector<1x32xf32>
      %282 = vector.broadcast %281 : vector<1x32xf32> to vector<16x32xf32>
      %283 = arith.mulf %282, %100 : vector<16x32xf32>
      %284 = math.exp %283 : vector<16x32xf32>
      %285 = vector.extract_strided_slice %127 {offsets = [7, 0], sizes = [1, 32], strides = [1, 1]} : vector<8x32xf32> to vector<1x32xf32>
      %286 = vector.extract_strided_slice %130 {offsets = [7, 0, 0], sizes = [1, 16, 1], strides = [1, 1, 1]} : vector<8x16x1xf32> to vector<1x16x1xf32>
      %287 = vector.shape_cast %286 : vector<1x16x1xf32> to vector<16x1xf32>
      %288 = vector.broadcast %285 : vector<1x32xf32> to vector<16x32xf32>
      %289 = vector.broadcast %287 : vector<16x1xf32> to vector<16x32xf32>
      %290 = arith.mulf %288, %289 : vector<16x32xf32>
      %291 = arith.mulf %284, %271 : vector<16x32xf32>
      %292 = arith.addf %291, %290 : vector<16x32xf32>
      %293 = vector.extract_strided_slice %133 {offsets = [7, 0, 0], sizes = [1, 16, 1], strides = [1, 1, 1]} : vector<8x16x1xf32> to vector<1x16x1xf32>
      %294 = vector.shape_cast %293 : vector<1x16x1xf32> to vector<16x1xf32>
      %295 = vector.broadcast %294 : vector<16x1xf32> to vector<16x32xf32>
      %296 = arith.mulf %292, %295 : vector<16x32xf32>
      %cst_91 = arith.constant dense<0.000000e+00> : vector<32xf32>
      %297 = vector.multi_reduction <add>, %296, %cst_91 [0] : vector<16x32xf32> to vector<32xf32>
      %298 = vector.shape_cast %297 : vector<32xf32> to vector<1x32xf32>
      %c7_i32 = arith.constant 7 : i32
      %299 = arith.addi %123, %c7_i32 : i32
      %300 = arith.index_cast %299 : i32 to index
      %c0_92 = arith.constant 0 : index
      %301 = vector.load %arg16[%300, %c0_92] : memref<32x32xf32, #tpu.memory_space<vmem>>, vector<1x32xf32>
      tpu.vector_store %arg16[%300, %c0_92], %298 {strides = array<i32>} : memref<32x32xf32, #tpu.memory_space<vmem>>, vector<1x32xf32>,
      scf.yield %292 : vector<16x32xf32>
    }
    %c2_i32_53 = arith.constant 2 : i32
    %cst_54 = arith.constant 0.000000e+00 : f32
    %104 = vector.broadcast %cst_54 : f32 to vector<16x32xf32>
    %c0_i32_55 = arith.constant 0 : i32
    %c2_i32_56 = arith.constant 2 : i32
    %105 = arith.addi %c0_i32_55, %c2_i32_56 : i32
    %c1_i32_57 = arith.constant 1 : i32
    %106 = scf.for %arg17 = %c0_i32_55 to %105 step %c1_i32_57 iter_args(%arg18 = %104) -> (vector<16x32xf32>)  : i32 {
      %c8_i32 = arith.constant 8 : i32
      %121 = arith.muli %arg17, %c8_i32 : i32
      %c16_i32 = arith.constant 16 : i32
      %122 = arith.addi %c16_i32, %121 : i32
      %123 = tpu.assume_multiple %122, 8 : i32
      %124 = arith.index_cast %123 : i32 to index
      %c0_69 = arith.constant 0 : index
      %125 = vector.load %arg12[%124, %c0_69] : memref<32x32xf32, #tpu.memory_space<vmem>>, vector<8x32xf32>
      %126 = arith.index_cast %123 : i32 to index
      %c0_70 = arith.constant 0 : index
      %127 = vector.load %arg13[%126, %c0_70] : memref<32x32xf32, #tpu.memory_space<vmem>>, vector<8x32xf32>
      %128 = arith.index_cast %123 : i32 to index
      %c0_71 = arith.constant 0 : index
      %129 = vector.load %arg14[%128, %c0_71] : memref<32x16xf32, #tpu.memory_space<vmem>>, vector<8x16xf32>
      %130 = vector.shape_cast %129 : vector<8x16xf32> to vector<8x16x1xf32>
      %131 = arith.index_cast %123 : i32 to index
      %c0_72 = arith.constant 0 : index
      %132 = vector.load %arg15[%131, %c0_72] : memref<32x16xf32, #tpu.memory_space<vmem>>, vector<8x16xf32>
      %133 = vector.shape_cast %132 : vector<8x16xf32> to vector<8x16x1xf32>
      %134 = vector.extract_strided_slice %125 {offsets = [0, 0], sizes = [1, 32], strides = [1, 1]} : vector<8x32xf32> to vector<1x32xf32>
      %135 = vector.broadcast %134 : vector<1x32xf32> to vector<16x32xf32>
      %136 = arith.mulf %135, %100 : vector<16x32xf32>
      %137 = math.exp %136 : vector<16x32xf32>
      %138 = vector.extract_strided_slice %127 {offsets = [0, 0], sizes = [1, 32], strides = [1, 1]} : vector<8x32xf32> to vector<1x32xf32>
      %139 = vector.extract_strided_slice %130 {offsets = [0, 0, 0], sizes = [1, 16, 1], strides = [1, 1, 1]} : vector<8x16x1xf32> to vector<1x16x1xf32>
      %140 = vector.shape_cast %139 : vector<1x16x1xf32> to vector<16x1xf32>
      %141 = vector.broadcast %138 : vector<1x32xf32> to vector<16x32xf32>
      %142 = vector.broadcast %140 : vector<16x1xf32> to vector<16x32xf32>
      %143 = arith.mulf %141, %142 : vector<16x32xf32>
      %144 = arith.mulf %137, %arg18 : vector<16x32xf32>
      %145 = arith.addf %144, %143 : vector<16x32xf32>
      %146 = vector.extract_strided_slice %133 {offsets = [0, 0, 0], sizes = [1, 16, 1], strides = [1, 1, 1]} : vector<8x16x1xf32> to vector<1x16x1xf32>
      %147 = vector.shape_cast %146 : vector<1x16x1xf32> to vector<16x1xf32>
      %148 = vector.broadcast %147 : vector<16x1xf32> to vector<16x32xf32>
      %149 = arith.mulf %145, %148 : vector<16x32xf32>
      %cst_73 = arith.constant dense<0.000000e+00> : vector<32xf32>
      %150 = vector.multi_reduction <add>, %149, %cst_73 [0] : vector<16x32xf32> to vector<32xf32>
      %151 = vector.shape_cast %150 : vector<32xf32> to vector<1x32xf32>
      %c0_i32_74 = arith.constant 0 : i32
      %152 = arith.addi %123, %c0_i32_74 : i32
      %153 = arith.index_cast %152 : i32 to index
      %c0_75 = arith.constant 0 : index
      %154 = vector.load %arg16[%153, %c0_75] : memref<32x32xf32, #tpu.memory_space<vmem>>, vector<1x32xf32>
      tpu.vector_store %arg16[%153, %c0_75], %151 {strides = array<i32>} : memref<32x32xf32, #tpu.memory_space<vmem>>, vector<1x32xf32>,
      %155 = vector.extract_strided_slice %125 {offsets = [1, 0], sizes = [1, 32], strides = [1, 1]} : vector<8x32xf32> to vector<1x32xf32>
      %156 = vector.broadcast %155 : vector<1x32xf32> to vector<16x32xf32>
      %157 = arith.mulf %156, %100 : vector<16x32xf32>
      %158 = math.exp %157 : vector<16x32xf32>
      %159 = vector.extract_strided_slice %127 {offsets = [1, 0], sizes = [1, 32], strides = [1, 1]} : vector<8x32xf32> to vector<1x32xf32>
      %160 = vector.extract_strided_slice %130 {offsets = [1, 0, 0], sizes = [1, 16, 1], strides = [1, 1, 1]} : vector<8x16x1xf32> to vector<1x16x1xf32>
      %161 = vector.shape_cast %160 : vector<1x16x1xf32> to vector<16x1xf32>
      %162 = vector.broadcast %159 : vector<1x32xf32> to vector<16x32xf32>
      %163 = vector.broadcast %161 : vector<16x1xf32> to vector<16x32xf32>
      %164 = arith.mulf %162, %163 : vector<16x32xf32>
      %165 = arith.mulf %158, %145 : vector<16x32xf32>
      %166 = arith.addf %165, %164 : vector<16x32xf32>
      %167 = vector.extract_strided_slice %133 {offsets = [1, 0, 0], sizes = [1, 16, 1], strides = [1, 1, 1]} : vector<8x16x1xf32> to vector<1x16x1xf32>
      %168 = vector.shape_cast %167 : vector<1x16x1xf32> to vector<16x1xf32>
      %169 = vector.broadcast %168 : vector<16x1xf32> to vector<16x32xf32>
      %170 = arith.mulf %166, %169 : vector<16x32xf32>
      %cst_76 = arith.constant dense<0.000000e+00> : vector<32xf32>
      %171 = vector.multi_reduction <add>, %170, %cst_76 [0] : vector<16x32xf32> to vector<32xf32>
      %172 = vector.shape_cast %171 : vector<32xf32> to vector<1x32xf32>
      %c1_i32_77 = arith.constant 1 : i32
      %173 = arith.addi %123, %c1_i32_77 : i32
      %174 = arith.index_cast %173 : i32 to index
      %c0_78 = arith.constant 0 : index
      %175 = vector.load %arg16[%174, %c0_78] : memref<32x32xf32, #tpu.memory_space<vmem>>, vector<1x32xf32>
      tpu.vector_store %arg16[%174, %c0_78], %172 {strides = array<i32>} : memref<32x32xf32, #tpu.memory_space<vmem>>, vector<1x32xf32>,
      %176 = vector.extract_strided_slice %125 {offsets = [2, 0], sizes = [1, 32], strides = [1, 1]} : vector<8x32xf32> to vector<1x32xf32>
      %177 = vector.broadcast %176 : vector<1x32xf32> to vector<16x32xf32>
      %178 = arith.mulf %177, %100 : vector<16x32xf32>
      %179 = math.exp %178 : vector<16x32xf32>
      %180 = vector.extract_strided_slice %127 {offsets = [2, 0], sizes = [1, 32], strides = [1, 1]} : vector<8x32xf32> to vector<1x32xf32>
      %181 = vector.extract_strided_slice %130 {offsets = [2, 0, 0], sizes = [1, 16, 1], strides = [1, 1, 1]} : vector<8x16x1xf32> to vector<1x16x1xf32>
      %182 = vector.shape_cast %181 : vector<1x16x1xf32> to vector<16x1xf32>
      %183 = vector.broadcast %180 : vector<1x32xf32> to vector<16x32xf32>
      %184 = vector.broadcast %182 : vector<16x1xf32> to vector<16x32xf32>
      %185 = arith.mulf %183, %184 : vector<16x32xf32>
      %186 = arith.mulf %179, %166 : vector<16x32xf32>
      %187 = arith.addf %186, %185 : vector<16x32xf32>
      %188 = vector.extract_strided_slice %133 {offsets = [2, 0, 0], sizes = [1, 16, 1], strides = [1, 1, 1]} : vector<8x16x1xf32> to vector<1x16x1xf32>
      %189 = vector.shape_cast %188 : vector<1x16x1xf32> to vector<16x1xf32>
      %190 = vector.broadcast %189 : vector<16x1xf32> to vector<16x32xf32>
      %191 = arith.mulf %187, %190 : vector<16x32xf32>
      %cst_79 = arith.constant dense<0.000000e+00> : vector<32xf32>
      %192 = vector.multi_reduction <add>, %191, %cst_79 [0] : vector<16x32xf32> to vector<32xf32>
      %193 = vector.shape_cast %192 : vector<32xf32> to vector<1x32xf32>
      %c2_i32_80 = arith.constant 2 : i32
      %194 = arith.addi %123, %c2_i32_80 : i32
      %195 = arith.index_cast %194 : i32 to index
      %c0_81 = arith.constant 0 : index
      %196 = vector.load %arg16[%195, %c0_81] : memref<32x32xf32, #tpu.memory_space<vmem>>, vector<1x32xf32>
      tpu.vector_store %arg16[%195, %c0_81], %193 {strides = array<i32>} : memref<32x32xf32, #tpu.memory_space<vmem>>, vector<1x32xf32>,
      %197 = vector.extract_strided_slice %125 {offsets = [3, 0], sizes = [1, 32], strides = [1, 1]} : vector<8x32xf32> to vector<1x32xf32>
      %198 = vector.broadcast %197 : vector<1x32xf32> to vector<16x32xf32>
      %199 = arith.mulf %198, %100 : vector<16x32xf32>
      %200 = math.exp %199 : vector<16x32xf32>
      %201 = vector.extract_strided_slice %127 {offsets = [3, 0], sizes = [1, 32], strides = [1, 1]} : vector<8x32xf32> to vector<1x32xf32>
      %202 = vector.extract_strided_slice %130 {offsets = [3, 0, 0], sizes = [1, 16, 1], strides = [1, 1, 1]} : vector<8x16x1xf32> to vector<1x16x1xf32>
      %203 = vector.shape_cast %202 : vector<1x16x1xf32> to vector<16x1xf32>
      %204 = vector.broadcast %201 : vector<1x32xf32> to vector<16x32xf32>
      %205 = vector.broadcast %203 : vector<16x1xf32> to vector<16x32xf32>
      %206 = arith.mulf %204, %205 : vector<16x32xf32>
      %207 = arith.mulf %200, %187 : vector<16x32xf32>
      %208 = arith.addf %207, %206 : vector<16x32xf32>
      %209 = vector.extract_strided_slice %133 {offsets = [3, 0, 0], sizes = [1, 16, 1], strides = [1, 1, 1]} : vector<8x16x1xf32> to vector<1x16x1xf32>
      %210 = vector.shape_cast %209 : vector<1x16x1xf32> to vector<16x1xf32>
      %211 = vector.broadcast %210 : vector<16x1xf32> to vector<16x32xf32>
      %212 = arith.mulf %208, %211 : vector<16x32xf32>
      %cst_82 = arith.constant dense<0.000000e+00> : vector<32xf32>
      %213 = vector.multi_reduction <add>, %212, %cst_82 [0] : vector<16x32xf32> to vector<32xf32>
      %214 = vector.shape_cast %213 : vector<32xf32> to vector<1x32xf32>
      %c3_i32 = arith.constant 3 : i32
      %215 = arith.addi %123, %c3_i32 : i32
      %216 = arith.index_cast %215 : i32 to index
      %c0_83 = arith.constant 0 : index
      %217 = vector.load %arg16[%216, %c0_83] : memref<32x32xf32, #tpu.memory_space<vmem>>, vector<1x32xf32>
      tpu.vector_store %arg16[%216, %c0_83], %214 {strides = array<i32>} : memref<32x32xf32, #tpu.memory_space<vmem>>, vector<1x32xf32>,
      %218 = vector.extract_strided_slice %125 {offsets = [4, 0], sizes = [1, 32], strides = [1, 1]} : vector<8x32xf32> to vector<1x32xf32>
      %219 = vector.broadcast %218 : vector<1x32xf32> to vector<16x32xf32>
      %220 = arith.mulf %219, %100 : vector<16x32xf32>
      %221 = math.exp %220 : vector<16x32xf32>
      %222 = vector.extract_strided_slice %127 {offsets = [4, 0], sizes = [1, 32], strides = [1, 1]} : vector<8x32xf32> to vector<1x32xf32>
      %223 = vector.extract_strided_slice %130 {offsets = [4, 0, 0], sizes = [1, 16, 1], strides = [1, 1, 1]} : vector<8x16x1xf32> to vector<1x16x1xf32>
      %224 = vector.shape_cast %223 : vector<1x16x1xf32> to vector<16x1xf32>
      %225 = vector.broadcast %222 : vector<1x32xf32> to vector<16x32xf32>
      %226 = vector.broadcast %224 : vector<16x1xf32> to vector<16x32xf32>
      %227 = arith.mulf %225, %226 : vector<16x32xf32>
      %228 = arith.mulf %221, %208 : vector<16x32xf32>
      %229 = arith.addf %228, %227 : vector<16x32xf32>
      %230 = vector.extract_strided_slice %133 {offsets = [4, 0, 0], sizes = [1, 16, 1], strides = [1, 1, 1]} : vector<8x16x1xf32> to vector<1x16x1xf32>
      %231 = vector.shape_cast %230 : vector<1x16x1xf32> to vector<16x1xf32>
      %232 = vector.broadcast %231 : vector<16x1xf32> to vector<16x32xf32>
      %233 = arith.mulf %229, %232 : vector<16x32xf32>
      %cst_84 = arith.constant dense<0.000000e+00> : vector<32xf32>
      %234 = vector.multi_reduction <add>, %233, %cst_84 [0] : vector<16x32xf32> to vector<32xf32>
      %235 = vector.shape_cast %234 : vector<32xf32> to vector<1x32xf32>
      %c4_i32 = arith.constant 4 : i32
      %236 = arith.addi %123, %c4_i32 : i32
      %237 = arith.index_cast %236 : i32 to index
      %c0_85 = arith.constant 0 : index
      %238 = vector.load %arg16[%237, %c0_85] : memref<32x32xf32, #tpu.memory_space<vmem>>, vector<1x32xf32>
      tpu.vector_store %arg16[%237, %c0_85], %235 {strides = array<i32>} : memref<32x32xf32, #tpu.memory_space<vmem>>, vector<1x32xf32>,
      %239 = vector.extract_strided_slice %125 {offsets = [5, 0], sizes = [1, 32], strides = [1, 1]} : vector<8x32xf32> to vector<1x32xf32>
      %240 = vector.broadcast %239 : vector<1x32xf32> to vector<16x32xf32>
      %241 = arith.mulf %240, %100 : vector<16x32xf32>
      %242 = math.exp %241 : vector<16x32xf32>
      %243 = vector.extract_strided_slice %127 {offsets = [5, 0], sizes = [1, 32], strides = [1, 1]} : vector<8x32xf32> to vector<1x32xf32>
      %244 = vector.extract_strided_slice %130 {offsets = [5, 0, 0], sizes = [1, 16, 1], strides = [1, 1, 1]} : vector<8x16x1xf32> to vector<1x16x1xf32>
      %245 = vector.shape_cast %244 : vector<1x16x1xf32> to vector<16x1xf32>
      %246 = vector.broadcast %243 : vector<1x32xf32> to vector<16x32xf32>
      %247 = vector.broadcast %245 : vector<16x1xf32> to vector<16x32xf32>
      %248 = arith.mulf %246, %247 : vector<16x32xf32>
      %249 = arith.mulf %242, %229 : vector<16x32xf32>
      %250 = arith.addf %249, %248 : vector<16x32xf32>
      %251 = vector.extract_strided_slice %133 {offsets = [5, 0, 0], sizes = [1, 16, 1], strides = [1, 1, 1]} : vector<8x16x1xf32> to vector<1x16x1xf32>
      %252 = vector.shape_cast %251 : vector<1x16x1xf32> to vector<16x1xf32>
      %253 = vector.broadcast %252 : vector<16x1xf32> to vector<16x32xf32>
      %254 = arith.mulf %250, %253 : vector<16x32xf32>
      %cst_86 = arith.constant dense<0.000000e+00> : vector<32xf32>
      %255 = vector.multi_reduction <add>, %254, %cst_86 [0] : vector<16x32xf32> to vector<32xf32>
      %256 = vector.shape_cast %255 : vector<32xf32> to vector<1x32xf32>
      %c5_i32 = arith.constant 5 : i32
      %257 = arith.addi %123, %c5_i32 : i32
      %258 = arith.index_cast %257 : i32 to index
      %c0_87 = arith.constant 0 : index
      %259 = vector.load %arg16[%258, %c0_87] : memref<32x32xf32, #tpu.memory_space<vmem>>, vector<1x32xf32>
      tpu.vector_store %arg16[%258, %c0_87], %256 {strides = array<i32>} : memref<32x32xf32, #tpu.memory_space<vmem>>, vector<1x32xf32>,
      %260 = vector.extract_strided_slice %125 {offsets = [6, 0], sizes = [1, 32], strides = [1, 1]} : vector<8x32xf32> to vector<1x32xf32>
      %261 = vector.broadcast %260 : vector<1x32xf32> to vector<16x32xf32>
      %262 = arith.mulf %261, %100 : vector<16x32xf32>
      %263 = math.exp %262 : vector<16x32xf32>
      %264 = vector.extract_strided_slice %127 {offsets = [6, 0], sizes = [1, 32], strides = [1, 1]} : vector<8x32xf32> to vector<1x32xf32>
      %265 = vector.extract_strided_slice %130 {offsets = [6, 0, 0], sizes = [1, 16, 1], strides = [1, 1, 1]} : vector<8x16x1xf32> to vector<1x16x1xf32>
      %266 = vector.shape_cast %265 : vector<1x16x1xf32> to vector<16x1xf32>
      %267 = vector.broadcast %264 : vector<1x32xf32> to vector<16x32xf32>
      %268 = vector.broadcast %266 : vector<16x1xf32> to vector<16x32xf32>
      %269 = arith.mulf %267, %268 : vector<16x32xf32>
      %270 = arith.mulf %263, %250 : vector<16x32xf32>
      %271 = arith.addf %270, %269 : vector<16x32xf32>
      %272 = vector.extract_strided_slice %133 {offsets = [6, 0, 0], sizes = [1, 16, 1], strides = [1, 1, 1]} : vector<8x16x1xf32> to vector<1x16x1xf32>
      %273 = vector.shape_cast %272 : vector<1x16x1xf32> to vector<16x1xf32>
      %274 = vector.broadcast %273 : vector<16x1xf32> to vector<16x32xf32>
      %275 = arith.mulf %271, %274 : vector<16x32xf32>
      %cst_88 = arith.constant dense<0.000000e+00> : vector<32xf32>
      %276 = vector.multi_reduction <add>, %275, %cst_88 [0] : vector<16x32xf32> to vector<32xf32>
      %277 = vector.shape_cast %276 : vector<32xf32> to vector<1x32xf32>
      %c6_i32 = arith.constant 6 : i32
      %278 = arith.addi %123, %c6_i32 : i32
      %279 = arith.index_cast %278 : i32 to index
      %c0_89 = arith.constant 0 : index
      %280 = vector.load %arg16[%279, %c0_89] : memref<32x32xf32, #tpu.memory_space<vmem>>, vector<1x32xf32>
      tpu.vector_store %arg16[%279, %c0_89], %277 {strides = array<i32>} : memref<32x32xf32, #tpu.memory_space<vmem>>, vector<1x32xf32>,
      %281 = vector.extract_strided_slice %125 {offsets = [7, 0], sizes = [1, 32], strides = [1, 1]} : vector<8x32xf32> to vector<1x32xf32>
      %282 = vector.broadcast %281 : vector<1x32xf32> to vector<16x32xf32>
      %283 = arith.mulf %282, %100 : vector<16x32xf32>
      %284 = math.exp %283 : vector<16x32xf32>
      %285 = vector.extract_strided_slice %127 {offsets = [7, 0], sizes = [1, 32], strides = [1, 1]} : vector<8x32xf32> to vector<1x32xf32>
      %286 = vector.extract_strided_slice %130 {offsets = [7, 0, 0], sizes = [1, 16, 1], strides = [1, 1, 1]} : vector<8x16x1xf32> to vector<1x16x1xf32>
      %287 = vector.shape_cast %286 : vector<1x16x1xf32> to vector<16x1xf32>
      %288 = vector.broadcast %285 : vector<1x32xf32> to vector<16x32xf32>
      %289 = vector.broadcast %287 : vector<16x1xf32> to vector<16x32xf32>
      %290 = arith.mulf %288, %289 : vector<16x32xf32>
      %291 = arith.mulf %284, %271 : vector<16x32xf32>
      %292 = arith.addf %291, %290 : vector<16x32xf32>
      %293 = vector.extract_strided_slice %133 {offsets = [7, 0, 0], sizes = [1, 16, 1], strides = [1, 1, 1]} : vector<8x16x1xf32> to vector<1x16x1xf32>
      %294 = vector.shape_cast %293 : vector<1x16x1xf32> to vector<16x1xf32>
      %295 = vector.broadcast %294 : vector<16x1xf32> to vector<16x32xf32>
      %296 = arith.mulf %292, %295 : vector<16x32xf32>
      %cst_90 = arith.constant dense<0.000000e+00> : vector<32xf32>
      %297 = vector.multi_reduction <add>, %296, %cst_90 [0] : vector<16x32xf32> to vector<32xf32>
      %298 = vector.shape_cast %297 : vector<32xf32> to vector<1x32xf32>
      %c7_i32 = arith.constant 7 : i32
      %299 = arith.addi %123, %c7_i32 : i32
      %300 = arith.index_cast %299 : i32 to index
      %c0_91 = arith.constant 0 : index
      %301 = vector.load %arg16[%300, %c0_91] : memref<32x32xf32, #tpu.memory_space<vmem>>, vector<1x32xf32>
      tpu.vector_store %arg16[%300, %c0_91], %298 {strides = array<i32>} : memref<32x32xf32, #tpu.memory_space<vmem>>, vector<1x32xf32>,
      scf.yield %292 : vector<16x32xf32>
    }
    %c2_i32_58 = arith.constant 2 : i32
    %c0_59 = arith.constant 0 : index
    %c0_60 = arith.constant 0 : index
    %107 = vector.load %arg16[%c0_59, %c0_60] : memref<32x32xf32, #tpu.memory_space<vmem>>, vector<32x32xf32>
    %c0_61 = arith.constant 0 : index
    %c0_62 = arith.constant 0 : index
    %108 = vector.load %arg8[%c0_61, %c0_62] : memref<1x32xf32, #tpu.memory_space<vmem>>, vector<1x32xf32>
    %109 = vector.broadcast %108 : vector<1x32xf32> to vector<32x32xf32>
    %110 = arith.mulf %109, %65 : vector<32x32xf32>
    %111 = arith.addf %107, %110 : vector<32x32xf32>
    %c0_63 = arith.constant 0 : index
    %c0_64 = arith.constant 0 : index
    %112 = vector.load %arg9[%c0_63, %c0_64] : memref<64x128xbf16, #tpu.memory_space<vmem>>, vector<64x128xbf16>
    %113 = arith.truncf %111 : vector<32x32xf32> to vector<32x32xbf16>
    %114 = vector.extract_strided_slice %112 {offsets = [0, 0], sizes = [32, 128], strides = [1, 1]} : vector<64x128xbf16> to vector<32x128xbf16>
    %cst_65 = arith.constant dense<0.000000e+00> : vector<32x128xf32>
    %115 = tpu.matmul %113, %114, %cst_65 {dimension_numbers = #tpu.dot_dimension_numbers<[1], [0], [0], [1], [0, 0, 1, 1], [], []>} : vector<32x32xbf16>, vector<32x128xbf16>, vector<32x128xf32> -> vector<32x128xf32>
    %116 = arith.truncf %66 : vector<32x32xf32> to vector<32x32xbf16>
    %117 = vector.extract_strided_slice %112 {offsets = [32, 0], sizes = [32, 128], strides = [1, 1]} : vector<64x128xbf16> to vector<32x128xbf16>
    %cst_66 = arith.constant dense<0.000000e+00> : vector<32x128xf32>
    %118 = tpu.matmul %116, %117, %cst_66 {dimension_numbers = #tpu.dot_dimension_numbers<[1], [0], [0], [1], [0, 0, 1, 1], [], []>} : vector<32x32xbf16>, vector<32x128xbf16>, vector<32x128xf32> -> vector<32x128xf32>
    %119 = arith.addf %115, %118 : vector<32x128xf32>
    %c0_67 = arith.constant 0 : index
    %c0_68 = arith.constant 0 : index
    %120 = vector.load %arg10[%c0_67, %c0_68] : memref<32x128xf32, #tpu.memory_space<vmem>>, vector<32x128xf32>
    tpu.vector_store %arg10[%c0_67, %c0_68], %119 {strides = array<i32>} : memref<32x128xf32, #tpu.memory_space<vmem>>, vector<32x128xf32>,
    return
  }
  func.func @transform_0(%arg0: i32) -> (i32, i32) {
    %c0_i32 = arith.constant 0 : i32
    %c0_i32_0 = arith.constant 0 : i32
    return %arg0, %c0_i32 : i32, i32
  }
  func.func @transform_1(%arg0: i32) -> (i32, i32) {
    %c0_i32 = arith.constant 0 : i32
    %c0_i32_0 = arith.constant 0 : i32
    %c0_i32_1 = arith.constant 0 : i32
    return %c0_i32, %c0_i32_0 : i32, i32
  }
  func.func @transform_2(%arg0: i32) -> (i32, i32) {
    %c0_i32 = arith.constant 0 : i32
    %c0_i32_0 = arith.constant 0 : i32
    %c0_i32_1 = arith.constant 0 : i32
    return %c0_i32, %c0_i32_0 : i32, i32
  }
  func.func @transform_3(%arg0: i32) -> (i32, i32) {
    %c0_i32 = arith.constant 0 : i32
    %c0_i32_0 = arith.constant 0 : i32
    %c0_i32_1 = arith.constant 0 : i32
    return %c0_i32, %c0_i32_0 : i32, i32
  }
  func.func @transform_4(%arg0: i32) -> (i32, i32) {
    %c0_i32 = arith.constant 0 : i32
    %c0_i32_0 = arith.constant 0 : i32
    %c0_i32_1 = arith.constant 0 : i32
    return %c0_i32, %c0_i32_0 : i32, i32
  }
  func.func @transform_5(%arg0: i32) -> (i32, i32) {
    %c0_i32 = arith.constant 0 : i32
    %c0_i32_0 = arith.constant 0 : i32
    %c0_i32_1 = arith.constant 0 : i32
    return %c0_i32, %c0_i32_0 : i32, i32
  }
  func.func @transform_6(%arg0: i32) -> (i32, i32) {
    %c0_i32 = arith.constant 0 : i32
    %c0_i32_0 = arith.constant 0 : i32
    %c0_i32_1 = arith.constant 0 : i32
    return %c0_i32, %c0_i32_0 : i32, i32
  }
  func.func @transform_7(%arg0: i32) -> (i32, i32) {
    %c0_i32 = arith.constant 0 : i32
    %c0_i32_0 = arith.constant 0 : i32
    %c0_i32_1 = arith.constant 0 : i32
    return %c0_i32, %c0_i32_0 : i32, i32
  }
  func.func @transform_8(%arg0: i32) -> (i32, i32) {
    %c0_i32 = arith.constant 0 : i32
    %c0_i32_0 = arith.constant 0 : i32
    %c0_i32_1 = arith.constant 0 : i32
    return %c0_i32, %c0_i32_0 : i32, i32
  }
  func.func @transform_9(%arg0: i32) -> (i32, i32) {
    %c0_i32 = arith.constant 0 : i32
    %c0_i32_0 = arith.constant 0 : i32
    return %arg0, %c0_i32 : i32, i32
  }
}

</mosaic_0001>

<llo_original>
// kernel: tpu_custom_call.1
$region0: #{tpu_custom_call.1}
  #allocation0 [shape = 'u32[]', space=smem, size = 0x4, offset = 0x4, fixed_abs, tag = 'smem constant byte address 0x4 - core index']
  #allocation1 [shape = 'u32[72,128]{1,0:T(1,128)}', space=vmem, size = 0x9000, scoped, tag = 'internal scratch']
  #allocation2 [shape = 'f32[48,64]{1,0:T(8,128)}', space=vmem, size = 0x6000, scoped, tag = 'scratch operand']
  #allocation3 [shape = 'f32[32,32]{1,0:T(8,128)}', space=vmem, size = 0x4000, scoped, tag = 'scratch operand']
  #allocation4 [shape = 'f32[32,32]{1,0:T(8,128)}', space=vmem, size = 0x4000, scoped, tag = 'scratch operand']
  #allocation5 [shape = 'f32[32,16]{1,0:T(8,128)}', space=vmem, size = 0x4000, scoped, tag = 'scratch operand']
  #allocation6 [shape = 'f32[32,16]{1,0:T(8,128)}', space=vmem, size = 0x4000, scoped, tag = 'scratch operand']
  #allocation7 [shape = 'f32[32,32]{1,0:T(8,128)}', space=vmem, size = 0x4000, scoped, tag = 'scratch operand']
  %s0 = inlined_call_operand.vmem [shape: bf16[32,128], index: 0, kind: input, shape index: {}]
  %s1 = inlined_call_operand.vmem [shape: bf16[128,64], index: 1, kind: input, shape index: {}]
  %s2 = inlined_call_operand.vmem [shape: f32[4,64], index: 2, kind: input, shape index: {}]
  %s3 = inlined_call_operand.vmem [shape: bf16[32,128], index: 3, kind: input, shape index: {}]
  %s4 = inlined_call_operand.vmem [shape: bf16[2,32], index: 4, kind: input, shape index: {}]
  %s5 = inlined_call_operand.vmem [shape: f32[1,32], index: 5, kind: input, shape index: {}]
  %s6 = inlined_call_operand.vmem [shape: f32[16,32], index: 6, kind: input, shape index: {}]
  %s7 = inlined_call_operand.vmem [shape: f32[1,32], index: 7, kind: input, shape index: {}]
  %s8 = inlined_call_operand.vmem [shape: bf16[64,128], index: 8, kind: input, shape index: {}]
  %s9 = inlined_call_operand.hbm [shape: f32[32,128], index: 9, kind: output, shape index: {}]
  %s10 = sld [smem:[#allocation0]]
  $region60: #{tpu_custom_call.1} parent=0
    _
  %s12 = ssub.s32 1, %s10
  %s13 = scalar_select 0, %s12, %s10
  $region1: #{tpu_custom_call.1} parent=0
    #allocation8 [shape = 'u8[16384]{0}', space=vmem, size = 0x4000, scoped, tag = 'output window, operand 0, single buffered']
    #allocation9 [shape = 's32[1]{0}', space=sflag, size = 0x4, scoped, tag = 'scoped memory for tpu_custom_call.1']
    %14 = vsyncpa [#allocation9], 0
    // Predicated region
    $region2: #{tpu_custom_call.1} parent=1 // pred_check
      _
    $region3: #{tpu_custom_call.1} parent=1 // pred_check_branch
      %16 = sbr.rel (0) target = $region5
    $region4: #{tpu_custom_call.1} parent=1 // pred_region
      _
    $region5: #{tpu_custom_call.1} parent=1 // pred_fallthru
      _
    // Predicated region
    $region6: #{tpu_custom_call.1} parent=1 // pred_check
      _
    $region7: #{tpu_custom_call.1} parent=1 // pred_check_branch
      %18 = sbr.rel (0) target = $region9
    $region8: #{tpu_custom_call.1} parent=1 // pred_region
      _
    $region9: #{tpu_custom_call.1} parent=1 // pred_fallthru
      _
    // Predicated region
    $region10: #{tpu_custom_call.1} parent=1 // pred_check
      _
    $region11: #{tpu_custom_call.1} parent=1 // pred_check_branch
      %20 = sbr.rel (0) target = $region13
    $region12: #{tpu_custom_call.1} parent=1 // pred_region
      _
    $region13: #{tpu_custom_call.1} parent=1 // pred_fallthru
      _
    // Predicated region
    $region14: #{tpu_custom_call.1} parent=1 // pred_check
      _
    $region15: #{tpu_custom_call.1} parent=1 // pred_check_branch
      %22 = sbr.rel (0) target = $region17
    $region16: #{tpu_custom_call.1} parent=1 // pred_region
      _
    $region17: #{tpu_custom_call.1} parent=1 // pred_fallthru
      _
    // Predicated region
    $region18: #{tpu_custom_call.1} parent=1 // pred_check
      _
    $region19: #{tpu_custom_call.1} parent=1 // pred_check_branch
      %24 = sbr.rel (0) target = $region21
    $region20: #{tpu_custom_call.1} parent=1 // pred_region
      _
    $region21: #{tpu_custom_call.1} parent=1 // pred_fallthru
      _
    // Predicated region
    $region22: #{tpu_custom_call.1} parent=1 // pred_check
      _
    $region23: #{tpu_custom_call.1} parent=1 // pred_check_branch
      %26 = sbr.rel (0) target = $region25
    $region24: #{tpu_custom_call.1} parent=1 // pred_region
      _
    $region25: #{tpu_custom_call.1} parent=1 // pred_fallthru
      _
    // Predicated region
    $region26: #{tpu_custom_call.1} parent=1 // pred_check
      _
    $region27: #{tpu_custom_call.1} parent=1 // pred_check_branch
      %28 = sbr.rel (0) target = $region29
    $region28: #{tpu_custom_call.1} parent=1 // pred_region
      _
    $region29: #{tpu_custom_call.1} parent=1 // pred_fallthru
      _
    // Predicated region
    $region30: #{tpu_custom_call.1} parent=1 // pred_check
      _
    $region31: #{tpu_custom_call.1} parent=1 // pred_check_branch
      %30 = sbr.rel (0) target = $region33
    $region32: #{tpu_custom_call.1} parent=1 // pred_region
      _
    $region33: #{tpu_custom_call.1} parent=1 // pred_fallthru
      _
    // Predicated region
    $region34: #{tpu_custom_call.1} parent=1 // pred_check
      _
    $region35: #{tpu_custom_call.1} parent=1 // pred_check_branch
      %32 = sbr.rel (0) target = $region37
    $region36: #{tpu_custom_call.1} parent=1 // pred_region
      _
    $region37: #{tpu_custom_call.1} parent=1 // pred_fallthru
      _
    %v34 = vld [vmem:[%s0] sm:$0xf]
    %v35 = vld [vmem:[%s0 + $0x4] sm:$0xf]
    %v36 = vld [vmem:[%s0 + $0x8] sm:$0xf]
    %v37 = vld [vmem:[%s0 + $0xc] sm:$0xf]
    %v38 = vld [vmem:[%s1] sm:$0xf]
    %v39 = vld [vmem:[%s1 + $0x4] sm:$0xf]
    %v40 = vld [vmem:[%s1 + $0x8] sm:$0xf]
    %v41 = vld [vmem:[%s1 + $0xc] sm:$0xf]
    %v42 = vld [vmem:[%s1 + $0x10] sm:$0xf]
    %v43 = vld [vmem:[%s1 + $0x14] sm:$0xf]
    %v44 = vld [vmem:[%s1 + $0x18] sm:$0xf]
    %v45 = vld [vmem:[%s1 + $0x1c] sm:$0xf]
    %v46 = vld [vmem:[%s1 + $0x20] sm:$0xf]
    %v47 = vld [vmem:[%s1 + $0x24] sm:$0xf]
    %v48 = vld [vmem:[%s1 + $0x28] sm:$0xf]
    %v49 = vld [vmem:[%s1 + $0x2c] sm:$0xf]
    %v50 = vld [vmem:[%s1 + $0x30] sm:$0xf]
    %v51 = vld [vmem:[%s1 + $0x34] sm:$0xf]
    %v52 = vld [vmem:[%s1 + $0x38] sm:$0xf]
    %v53 = vld [vmem:[%s1 + $0x3c] sm:$0xf]
    %v58 = vunpack.c.l.b16 %v34
    %v59 = vunpack.c.l.b16 %v35
    %v60 = vunpack.c.l.b16 %v36
    %v61 = vunpack.c.l.b16 %v37
    %v62 = vpack.c.b16 %v59, %v58
    %v63 = vpack.c.b16 %v61, %v60
    %v82 = vunpack.c.l.b16 %v38
    %v83 = vunpack.c.l.b16 %v39
    %v84 = vunpack.c.l.b16 %v40
    %v85 = vunpack.c.l.b16 %v41
    %v86 = vunpack.c.l.b16 %v42
    %v87 = vunpack.c.l.b16 %v43
    %v88 = vunpack.c.l.b16 %v44
    %v89 = vunpack.c.l.b16 %v45
    %v90 = vunpack.c.l.b16 %v46
    %v91 = vunpack.c.l.b16 %v47
    %v92 = vunpack.c.l.b16 %v48
    %v93 = vunpack.c.l.b16 %v49
    %v94 = vunpack.c.l.b16 %v50
    %v95 = vunpack.c.l.b16 %v51
    %v96 = vunpack.c.l.b16 %v52
    %v97 = vunpack.c.l.b16 %v53
    %v98 = vpack.c.b16 %v83, %v82
    %v99 = vpack.c.b16 %v85, %v84
    %v100 = vpack.c.b16 %v87, %v86
    %v101 = vpack.c.b16 %v89, %v88
    %v102 = vpack.c.b16 %v91, %v90
    %v103 = vpack.c.b16 %v93, %v92
    %v104 = vpack.c.b16 %v95, %v94
    %v105 = vpack.c.b16 %v97, %v96
    %114 = vmatpush.bf16.msra.mxu0 %v105
    %115 = vmatpush.bf16.msra.mxu0 %v104
    %116 = vmatpush.bf16.msra.mxu0 %v103
    %117 = vmatpush.bf16.msra.mxu0 %v102
    %118 = vmatpush.bf16.msra.mxu0 %v101
    %119 = vmatpush.bf16.msra.mxu0 %v100
    %120 = vmatpush.bf16.msra.mxu0 %v99
    %121 = vmatpush.bf16.msra.mxu0 %v98
    %122 = vmatmul.bf16.gmra.mxu0 %v62
    %v123 = vpop.f32.mrf.mxu0
    %v124 = vadd.f32 0.0, %v123
    %v125 = vpop.f32.mrf.mxu0
    %v126 = vadd.f32 0.0, %v125
    %127 = vmatmul.bf16.gmra.mxu0 %v63
    %v128 = vpop.f32.mrf.mxu0
    %v129 = vadd.f32 0.0, %v128
    %v130 = vpop.f32.mrf.mxu0
    %v131 = vadd.f32 0.0, %v130
    %132 = vdwg.mxu0
    %v133 = vld [vmem:[%s2] sm:$0xf]
    %vm134 = vcmask 516096
    %135 = vst.msk [vmem:[#allocation2] sm:$0x1] %vm134, 0.0
    %vm136 = vcmask 517120
    %137 = vst.msk [vmem:[#allocation2 + $0x11] sm:$0x3] %vm136, 0.0
    %vm138 = vcmask 523264
    %139 = vst.msk [vmem:[#allocation2 + $0x1] sm:$0xff] %vm138, %v124
    %140 = vst.msk [vmem:[#allocation2 + $0x9] sm:$0xff] %vm138, %v126
    %v141 = vld [vmem:[#allocation2] sm:$0xff]
    %v142 = vld [vmem:[#allocation2 + $0x8] sm:$0xff]
    %v143 = vperm.slane %v133, 0
    %v144 = vmul.f32 %v143, %v141
    %v145 = vmul.f32 %v143, %v142
    %v146 = vadd.f32 %v144, 0.0
    %v147 = vadd.f32 %v145, 0.0
    %v148 = vld [vmem:[#allocation2 + $0x1] sm:$0xff]
    %v149 = vld [vmem:[#allocation2 + $0x9] sm:$0xff]
    %v150 = vperm.slane %v133, 1
    %v151 = vmul.f32 %v150, %v148
    %v152 = vmul.f32 %v150, %v149
    %v153 = vadd.f32 %v146, %v151
    %v154 = vadd.f32 %v147, %v152
    %v155 = vld [vmem:[#allocation2 + $0x2] sm:$0xff]
    %v156 = vld [vmem:[#allocation2 + $0xa] sm:$0xff]
    %v157 = vperm.slane %v133, 2
    %v158 = vmul.f32 %v157, %v155
    %v159 = vmul.f32 %v157, %v156
    %v160 = vadd.f32 %v153, %v158
    %v161 = vadd.f32 %v154, %v159
    %v162 = vld [vmem:[#allocation2 + $0x3] sm:$0xff]
    %v163 = vld [vmem:[#allocation2 + $0xb] sm:$0xff]
    %v164 = vperm.slane %v133, 3
    %v165 = vmul.f32 %v164, %v162
    %v166 = vmul.f32 %v164, %v163
    %v167 = vadd.f32 %v160, %v165
    %v168 = vadd.f32 %v161, %v166
    %169 = vst.msk [vmem:[#allocation2 + $0x18] sm:$0x1] %vm134, 0.0
    %170 = vst.msk [vmem:[#allocation2 + $0x29] sm:$0x3] %vm136, 0.0
    %171 = vst.msk [vmem:[#allocation2 + $0x19] sm:$0xff] %vm138, %v129
    %172 = vst.msk [vmem:[#allocation2 + $0x21] sm:$0xff] %vm138, %v131
    %v173 = vld [vmem:[#allocation2 + $0x18] sm:$0xff]
    %v174 = vld [vmem:[#allocation2 + $0x20] sm:$0xff]
    %v175 = vmul.f32 %v143, %v173
    %v176 = vmul.f32 %v143, %v174
    %v177 = vadd.f32 %v175, 0.0
    %v178 = vadd.f32 %v176, 0.0
    %v179 = vld [vmem:[#allocation2 + $0x19] sm:$0xff]
    %v180 = vld [vmem:[#allocation2 + $0x21] sm:$0xff]
    %v181 = vmul.f32 %v150, %v179
    %v182 = vmul.f32 %v150, %v180
    %v183 = vadd.f32 %v177, %v181
    %v184 = vadd.f32 %v178, %v182
    %v185 = vld [vmem:[#allocation2 + $0x1a] sm:$0xff]
    %v186 = vld [vmem:[#allocation2 + $0x22] sm:$0xff]
    %v187 = vmul.f32 %v157, %v185
    %v188 = vmul.f32 %v157, %v186
    %v189 = vadd.f32 %v183, %v187
    %v190 = vadd.f32 %v184, %v188
    %v191 = vld [vmem:[#allocation2 + $0x1b] sm:$0xff]
    %v192 = vld [vmem:[#allocation2 + $0x23] sm:$0xff]
    %v193 = vmul.f32 %v164, %v191
    %v194 = vmul.f32 %v164, %v192
    %v195 = vadd.f32 %v189, %v193
    %v196 = vadd.f32 %v190, %v194
    %v197 = vxor.u32 %v167, 2147483648
    %v198 = vxor.u32 %v168, 2147483648
    %v199 = vxor.u32 %v195, 2147483648
    %v200 = vxor.u32 %v196, 2147483648
    %v201 = vmul.f32 %v197, 1.442695
    %v202 = vpow.pop %v201
    %v203 = vmul.f32 %v198, 1.442695
    %v204 = vpow.pop %v203
    %v205 = vmul.f32 %v199, 1.442695
    %v206 = vpow.pop %v205
    %v207 = vmul.f32 %v200, 1.442695
    %v208 = vpow.pop %v207
    %v209 = vadd.f32 %v202, 1.0
    %v210 = vadd.f32 %v204, 1.0
    %v211 = vadd.f32 %v206, 1.0
    %v212 = vadd.f32 %v208, 1.0
    %v213 = vrcp.pop %v209
    %v214 = vmul.f32 %v209, %v213
    %v215 = vsub.f32 1.0, %v214
    %v216 = vmul.f32 %v213, %v215
    %v217 = vadd.f32 %v213, %v216
    %vm218 = vweird.f32 %v209
    %vm219 = vweird.f32 %v213
    %vm220 = vmor %vm218, %vm219
    %v221 = vsel %vm220, %v213, %v217
    %v222 = vand.u32 2147483647, %v209
    %vm223 = vcmp.eq.f32.partialorder %v222, 8.507059e+37
    %v224 = vand.u32 %v209, 2147483648
    %v225 = vor.u32 1.1754944e-38, %v224
    %v226 = vsel %vm223, %v225, %v221
    %v227 = vmul.f32 1.0, %v226
    %v228 = vrcp.pop %v210
    %v229 = vmul.f32 %v210, %v228
    %v230 = vsub.f32 1.0, %v229
    %v231 = vmul.f32 %v228, %v230
    %v232 = vadd.f32 %v228, %v231
    %vm233 = vweird.f32 %v210
    %vm234 = vweird.f32 %v228
    %vm235 = vmor %vm233, %vm234
    %v236 = vsel %vm235, %v228, %v232
    %v237 = vand.u32 2147483647, %v210
    %vm238 = vcmp.eq.f32.partialorder %v237, 8.507059e+37
    %v239 = vand.u32 %v210, 2147483648
    %v240 = vor.u32 1.1754944e-38, %v239
    %v241 = vsel %vm238, %v240, %v236
    %v242 = vmul.f32 1.0, %v241
    %v243 = vrcp.pop %v211
    %v244 = vmul.f32 %v211, %v243
    %v245 = vsub.f32 1.0, %v244
    %v246 = vmul.f32 %v243, %v245
    %v247 = vadd.f32 %v243, %v246
    %vm248 = vweird.f32 %v211
    %vm249 = vweird.f32 %v243
    %vm250 = vmor %vm248, %vm249
    %v251 = vsel %vm250, %v243, %v247
    %v252 = vand.u32 2147483647, %v211
    %vm253 = vcmp.eq.f32.partialorder %v252, 8.507059e+37
    %v254 = vand.u32 %v211, 2147483648
    %v255 = vor.u32 1.1754944e-38, %v254
    %v256 = vsel %vm253, %v255, %v251
    %v257 = vmul.f32 1.0, %v256
    %v258 = vrcp.pop %v212
    %v259 = vmul.f32 %v212, %v258
    %v260 = vsub.f32 1.0, %v259
    %v261 = vmul.f32 %v258, %v260
    %v262 = vadd.f32 %v258, %v261
    %vm263 = vweird.f32 %v212
    %vm264 = vweird.f32 %v258
    %vm265 = vmor %vm263, %vm264
    %v266 = vsel %vm265, %v258, %v262
    %v267 = vand.u32 2147483647, %v212
    %vm268 = vcmp.eq.f32.partialorder %v267, 8.507059e+37
    %v269 = vand.u32 %v212, 2147483648
    %v270 = vor.u32 1.1754944e-38, %v269
    %v271 = vsel %vm268, %v270, %v266
    %v272 = vmul.f32 1.0, %v271
    %v273 = vmul.f32 %v167, %v227
    %v274 = vmul.f32 %v168, %v242
    %v275 = vmul.f32 %v195, %v257
    %v276 = vmul.f32 %v196, %v272
    %v277 = vpack.c.bf16 %v274, %v273
    %v278 = vpack.c.bf16 %v276, %v275
    %v279 = vld [vmem:[%s3] sm:$0xf]
    %v280 = vld [vmem:[%s3 + $0x4] sm:$0xf]
    %v281 = vld [vmem:[%s3 + $0x8] sm:$0xf]
    %v282 = vld [vmem:[%s3 + $0xc] sm:$0xf]
    %v287 = vunpack.c.l.b16 %v279
    %v288 = vunpack.c.l.b16 %v280
    %v289 = vunpack.c.l.b16 %v281
    %v290 = vunpack.c.l.b16 %v282
    %v291 = vpack.c.b16 %v288, %v287
    %v292 = vpack.c.b16 %v290, %v289
    %vm295 = vcmask 261120
    %v297 = vsel %vm295, %v277, 0
    %v300 = vsel %vm295, %v278, 0
    %302 = vmatpush.bf16.msra.mxu0 0
    %303 = vmatpush.bf16.msra.mxu0 0
    %304 = vmatpush.bf16.msra.mxu0 0
    %305 = vmatpush.bf16.msra.mxu0 0
    %306 = vmatpush.bf16.msra.mxu0 0
    %307 = vmatpush.bf16.msra.mxu0 0
    %308 = vmatpush.bf16.msra.mxu0 %v292
    %309 = vmatpush.bf16.msra.mxu0 %v291
    %310 = vmatmul.bf16.gmra.mxu0 %v297
    %v311 = vpop.f32.mrf.mxu0
    %v312 = vadd.f32 0.0, %v311
    %v313 = vpop.f32.mrf.mxu0
    %v314 = vadd.f32 0.0, %v313
    %315 = vmatmul.bf16.gmra.mxu0 %v300
    %v316 = vpop.f32.mrf.mxu0
    %v317 = vadd.f32 0.0, %v316
    %v318 = vpop.f32.mrf.mxu0
    %v319 = vadd.f32 0.0, %v318
    %320 = vdwg.mxu0
    %325 = vrot.lane.b32.xlu0 %v312, 126
    %v326 = vpop.permute.xlu0 %325
    %327 = vrot.lane.b32.xlu0 %v314, 126
    %v328 = vpop.permute.xlu0 %327
    %329 = vrot.lane.b32.xlu0 %v317, 126
    %v330 = vpop.permute.xlu0 %329
    %331 = vrot.lane.b32.xlu0 %v319, 126
    %v332 = vpop.permute.xlu0 %331
    %vm337 = vcmask 130048
    %338 = vst.msk [vmem:[#allocation5] sm:$0xff] %vm337, %v326
    %339 = vst.msk [vmem:[#allocation5 + $0x8] sm:$0xff] %vm337, %v328
    %340 = vst.msk [vmem:[#allocation5 + $0x10] sm:$0xff] %vm337, %v330
    %341 = vst.msk [vmem:[#allocation5 + $0x18] sm:$0xff] %vm337, %v332
    %342 = vrot.lane.b32.xlu0 %v312, 110
    %v343 = vpop.permute.xlu0 %342
    %344 = vrot.lane.b32.xlu0 %v314, 110
    %v345 = vpop.permute.xlu0 %344
    %346 = vrot.lane.b32.xlu0 %v317, 110
    %v347 = vpop.permute.xlu0 %346
    %348 = vrot.lane.b32.xlu0 %v319, 110
    %v349 = vpop.permute.xlu0 %348
    %354 = vst.msk [vmem:[#allocation6] sm:$0xff] %vm337, %v343
    %355 = vst.msk [vmem:[#allocation6 + $0x8] sm:$0xff] %vm337, %v345
    %356 = vst.msk [vmem:[#allocation6 + $0x10] sm:$0xff] %vm337, %v347
    %357 = vst.msk [vmem:[#allocation6 + $0x18] sm:$0xff] %vm337, %v349
    %v358 = vpack.c.bf16 %v314, %v312
    %v359 = vpack.c.bf16 %v319, %v317
    %v360 = vld [vmem:[%s4] sm:$0x1]
    %v361 = vld [vmem:[%s5] sm:$0x1]
    %v362 = vmul.f32 %v361, 2.0
    %v364 = vperm.slane %v362, 0
    %vm366 = vcmask 15360
    %v368 = vsel %vm366, %v358, 0
    %v371 = vsel %vm366, %v359, 0
    %vm373 = vcmask 1040384
    %v375 = vsel %vm373, %v360, 0
    %377 = vmatpush.bf16.msra.mxu0 0
    %378 = vmatpush.bf16.msra.mxu0 0
    %379 = vmatpush.bf16.msra.mxu0 0
    %380 = vmatpush.bf16.msra.mxu0 0
    %381 = vmatpush.bf16.msra.mxu0 0
    %382 = vmatpush.bf16.msra.mxu0 0
    %383 = vmatpush.bf16.msra.mxu0 0
    %384 = vmatpush.bf16.msra.mxu0 %v375
    %385 = vmatmul.bf16.gmra.mxu0 %v368
    %v386 = vpop.f32.mrf.mxu0
    %v387 = vadd.f32 %v364, %v386
    %v388 = vpop.f32.mrf.mxu0
    %v389 = vadd.f32 %v364, %v388
    %390 = vmatmul.bf16.gmra.mxu0 %v371
    %v391 = vpop.f32.mrf.mxu0
    %v392 = vadd.f32 %v364, %v391
    %v393 = vpop.f32.mrf.mxu0
    %v394 = vadd.f32 %v364, %v393
    %395 = vdwg.mxu0
    %v396 = vmax.f32 %v387, 0.0
    %v397 = vmax.f32 %v389, 0.0
    %v398 = vmax.f32 %v392, 0.0
    %v399 = vmax.f32 %v394, 0.0
    %vm400 = vcmp.ne.f32.partialorder %v387, %v387
    %vm401 = vcmp.ne.f32.partialorder %v389, %v389
    %vm402 = vcmp.ne.f32.partialorder %v392, %v392
    %vm403 = vcmp.ne.f32.partialorder %v394, %v394
    %v404 = vadd.f32 %v387, 0.0
    %v405 = vadd.f32 %v389, 0.0
    %v406 = vadd.f32 %v392, 0.0
    %v407 = vadd.f32 %v394, 0.0
    %v408 = vand.u32 2147483647, %v387
    %v409 = vand.u32 2147483647, %v389
    %v410 = vand.u32 2147483647, %v392
    %v411 = vand.u32 2147483647, %v394
    %v412 = vsub.f32 0.0, %v408
    %v413 = vsub.f32 0.0, %v409
    %v414 = vsub.f32 0.0, %v410
    %v415 = vsub.f32 0.0, %v411
    %v416 = vmul.f32 %v412, 1.442695
    %v417 = vpow.pop %v416
    %v418 = vmul.f32 %v413, 1.442695
    %v419 = vpow.pop %v418
    %v420 = vmul.f32 %v414, 1.442695
    %v421 = vpow.pop %v420
    %v422 = vmul.f32 %v415, 1.442695
    %v423 = vpow.pop %v422
    %v424 = vadd.f32 %v417, 1.0
    %v425 = vlog2.pop %v424
    %v426 = vmul.f32 %v425, 0.6931472
    %v427 = vmul.f32 -0.5, %v417
    %v428 = vadd.f32 %v427, 1.0
    %v429 = vmul.f32 %v428, %v417
    %v430 = vand.u32 2147483647, %v417
    %vm431 = vcmp.lt.f32.partialorder %v430, 0.0004427343
    %v432 = vsel %vm431, %v429, %v426
    %v433 = vadd.f32 %v419, 1.0
    %v434 = vlog2.pop %v433
    %v435 = vmul.f32 %v434, 0.6931472
    %v436 = vmul.f32 -0.5, %v419
    %v437 = vadd.f32 %v436, 1.0
    %v438 = vmul.f32 %v437, %v419
    %v439 = vand.u32 2147483647, %v419
    %vm440 = vcmp.lt.f32.partialorder %v439, 0.0004427343
    %v441 = vsel %vm440, %v438, %v435
    %v442 = vadd.f32 %v421, 1.0
    %v443 = vlog2.pop %v442
    %v444 = vmul.f32 %v443, 0.6931472
    %v445 = vmul.f32 -0.5, %v421
    %v446 = vadd.f32 %v445, 1.0
    %v447 = vmul.f32 %v446, %v421
    %v448 = vand.u32 2147483647, %v421
    %vm449 = vcmp.lt.f32.partialorder %v448, 0.0004427343
    %v450 = vsel %vm449, %v447, %v444
    %v451 = vadd.f32 %v423, 1.0
    %v452 = vlog2.pop %v451
    %v453 = vmul.f32 %v452, 0.6931472
    %v454 = vmul.f32 -0.5, %v423
    %v455 = vadd.f32 %v454, 1.0
    %v456 = vmul.f32 %v455, %v423
    %v457 = vand.u32 2147483647, %v423
    %vm458 = vcmp.lt.f32.partialorder %v457, 0.0004427343
    %v459 = vsel %vm458, %v456, %v453
    %v460 = vadd.f32 %v396, %v432
    %v461 = vadd.f32 %v397, %v441
    %v462 = vadd.f32 %v398, %v450
    %v463 = vadd.f32 %v399, %v459
    %v464 = vsel %vm400, %v404, %v460
    %v465 = vsel %vm401, %v405, %v461
    %v466 = vsel %vm402, %v406, %v462
    %v467 = vsel %vm403, %v407, %v463
    %468 = vst.msk [vmem:[#allocation3] sm:$0xff] %vm295, %v464
    %469 = vst.msk [vmem:[#allocation3 + $0x8] sm:$0xff] %vm295, %v465
    %470 = vst.msk [vmem:[#allocation3 + $0x10] sm:$0xff] %vm295, %v466
    %471 = vst.msk [vmem:[#allocation3 + $0x18] sm:$0xff] %vm295, %v467
    %v472 = vmul.f32 %v464, %v273
    %v473 = vmul.f32 %v465, %v274
    %v474 = vmul.f32 %v466, %v275
    %v475 = vmul.f32 %v467, %v276
    %476 = vst.msk [vmem:[#allocation4] sm:$0xff] %vm295, %v472
    %477 = vst.msk [vmem:[#allocation4 + $0x8] sm:$0xff] %vm295, %v473
    %478 = vst.msk [vmem:[#allocation4 + $0x10] sm:$0xff] %vm295, %v474
    %479 = vst.msk [vmem:[#allocation4 + $0x18] sm:$0xff] %vm295, %v475
    %v480 = vld [vmem:[%s6] sm:$0xff]
    %v481 = vld [vmem:[%s6 + $0x8] sm:$0xff]
    loop: start=0, step=1, limit=2
    $region38: #{tpu_custom_call.1} parent=1 // loop_pre_header
      _
    $region39: #{tpu_custom_call.1} parent=1 // loop_header
      %s483 = sphi 0, %s487
      %p484 = scmp.ge.s32.totalorder %s483, 2
      %v488 = vphi 0.0, %v915
      %v489 = vphi 0.0, %v916
    $region40: #{tpu_custom_call.1} parent=1 // loop_header_branch
      %486 = sbr.rel (%p484) target = $region44
    $region41: #{tpu_custom_call.1} parent=1 // loop_body
      %s490 = smul.u32 %s483, 8
      %s491 = scalar_lea.vmem [#allocation3], %s490
      %v492 = vld [vmem:[%s491] sm:$0xff]
      %s493 = scalar_lea.vmem [#allocation4], %s490
      %v494 = vld [vmem:[%s493] sm:$0xff]
      %s495 = scalar_lea.vmem [#allocation5], %s490
      %v496 = vld [vmem:[%s495] sm:$0xff]
      %v497 = vperm.slane %v496, 0
      %v498 = vlaneseq
      %v499 = vshrl.u32 %v498, 7
      %501 = vset.pattern.permute.xlu0 %v499
      %502 = vperm.xlu0 %501, %v497
      %v503 = vpop.permute.xlu0 %502
      %v504 = vlaneseq
      %v505 = vshrl.u32 %v504, 7
      %v506 = vadd.s32 %v505, 8
      %507 = vset.pattern.permute.xlu0 %v506
      %508 = vperm.xlu0 %507, %v497
      %v509 = vpop.permute.xlu0 %508
      %v510 = vperm.slane %v496, 1
      %v511 = vlaneseq
      %v512 = vshrl.u32 %v511, 7
      %514 = vset.pattern.permute.xlu0 %v512
      %515 = vperm.xlu0 %514, %v510
      %v516 = vpop.permute.xlu0 %515
      %v517 = vlaneseq
      %v518 = vshrl.u32 %v517, 7
      %v519 = vadd.s32 %v518, 8
      %520 = vset.pattern.permute.xlu0 %v519
      %521 = vperm.xlu0 %520, %v510
      %v522 = vpop.permute.xlu0 %521
      %v523 = vperm.slane %v496, 2
      %v524 = vlaneseq
      %v525 = vshrl.u32 %v524, 7
      %527 = vset.pattern.permute.xlu0 %v525
      %528 = vperm.xlu0 %527, %v523
      %v529 = vpop.permute.xlu0 %528
      %v530 = vlaneseq
      %v531 = vshrl.u32 %v530, 7
      %v532 = vadd.s32 %v531, 8
      %533 = vset.pattern.permute.xlu0 %v532
      %534 = vperm.xlu0 %533, %v523
      %v535 = vpop.permute.xlu0 %534
      %v536 = vperm.slane %v496, 3
      %v537 = vlaneseq
      %v538 = vshrl.u32 %v537, 7
      %540 = vset.pattern.permute.xlu0 %v538
      %541 = vperm.xlu0 %540, %v536
      %v542 = vpop.permute.xlu0 %541
      %v543 = vlaneseq
      %v544 = vshrl.u32 %v543, 7
      %v545 = vadd.s32 %v544, 8
      %546 = vset.pattern.permute.xlu0 %v545
      %547 = vperm.xlu0 %546, %v536
      %v548 = vpop.permute.xlu0 %547
      %v549 = vperm.slane %v496, 4
      %v550 = vlaneseq
      %v551 = vshrl.u32 %v550, 7
      %553 = vset.pattern.permute.xlu0 %v551
      %554 = vperm.xlu0 %553, %v549
      %v555 = vpop.permute.xlu0 %554
      %v556 = vlaneseq
      %v557 = vshrl.u32 %v556, 7
      %v558 = vadd.s32 %v557, 8
      %559 = vset.pattern.permute.xlu0 %v558
      %560 = vperm.xlu0 %559, %v549
      %v561 = vpop.permute.xlu0 %560
      %v562 = vperm.slane %v496, 5
      %v563 = vlaneseq
      %v564 = vshrl.u32 %v563, 7
      %566 = vset.pattern.permute.xlu0 %v564
      %567 = vperm.xlu0 %566, %v562
      %v568 = vpop.permute.xlu0 %567
      %v569 = vlaneseq
      %v570 = vshrl.u32 %v569, 7
      %v571 = vadd.s32 %v570, 8
      %572 = vset.pattern.permute.xlu0 %v571
      %573 = vperm.xlu0 %572, %v562
      %v574 = vpop.permute.xlu0 %573
      %v575 = vperm.slane %v496, 6
      %v576 = vlaneseq
      %v577 = vshrl.u32 %v576, 7
      %579 = vset.pattern.permute.xlu0 %v577
      %580 = vperm.xlu0 %579, %v575
      %v581 = vpop.permute.xlu0 %580
      %v582 = vlaneseq
      %v583 = vshrl.u32 %v582, 7
      %v584 = vadd.s32 %v583, 8
      %585 = vset.pattern.permute.xlu0 %v584
      %586 = vperm.xlu0 %585, %v575
      %v587 = vpop.permute.xlu0 %586
      %v588 = vperm.slane %v496, 7
      %v589 = vlaneseq
      %v590 = vshrl.u32 %v589, 7
      %592 = vset.pattern.permute.xlu0 %v590
      %593 = vperm.xlu0 %592, %v588
      %v594 = vpop.permute.xlu0 %593
      %v595 = vlaneseq
      %v596 = vshrl.u32 %v595, 7
      %v597 = vadd.s32 %v596, 8
      %598 = vset.pattern.permute.xlu0 %v597
      %599 = vperm.xlu0 %598, %v588
      %v600 = vpop.permute.xlu0 %599
      %s601 = scalar_lea.vmem [#allocation6], %s490
      %v602 = vld [vmem:[%s601] sm:$0xff]
      %v603 = vperm.slane %v602, 0
      %v604 = vlaneseq
      %v605 = vshrl.u32 %v604, 7
      %607 = vset.pattern.permute.xlu0 %v605
      %608 = vperm.xlu0 %607, %v603
      %v609 = vpop.permute.xlu0 %608
      %v610 = vlaneseq
      %v611 = vshrl.u32 %v610, 7
      %v612 = vadd.s32 %v611, 8
      %613 = vset.pattern.permute.xlu0 %v612
      %614 = vperm.xlu0 %613, %v603
      %v615 = vpop.permute.xlu0 %614
      %v616 = vperm.slane %v602, 1
      %v617 = vlaneseq
      %v618 = vshrl.u32 %v617, 7
      %620 = vset.pattern.permute.xlu0 %v618
      %621 = vperm.xlu0 %620, %v616
      %v622 = vpop.permute.xlu0 %621
      %v623 = vlaneseq
      %v624 = vshrl.u32 %v623, 7
      %v625 = vadd.s32 %v624, 8
      %626 = vset.pattern.permute.xlu0 %v625
      %627 = vperm.xlu0 %626, %v616
      %v628 = vpop.permute.xlu0 %627
      %v629 = vperm.slane %v602, 2
      %v630 = vlaneseq
      %v631 = vshrl.u32 %v630, 7
      %633 = vset.pattern.permute.xlu0 %v631
      %634 = vperm.xlu0 %633, %v629
      %v635 = vpop.permute.xlu0 %634
      %v636 = vlaneseq
      %v637 = vshrl.u32 %v636, 7
      %v638 = vadd.s32 %v637, 8
      %639 = vset.pattern.permute.xlu0 %v638
      %640 = vperm.xlu0 %639, %v629
      %v641 = vpop.permute.xlu0 %640
      %v642 = vperm.slane %v602, 3
      %v643 = vlaneseq
      %v644 = vshrl.u32 %v643, 7
      %646 = vset.pattern.permute.xlu0 %v644
      %647 = vperm.xlu0 %646, %v642
      %v648 = vpop.permute.xlu0 %647
      %v649 = vlaneseq
      %v650 = vshrl.u32 %v649, 7
      %v651 = vadd.s32 %v650, 8
      %652 = vset.pattern.permute.xlu0 %v651
      %653 = vperm.xlu0 %652, %v642
      %v654 = vpop.permute.xlu0 %653
      %v655 = vperm.slane %v602, 4
      %v656 = vlaneseq
      %v657 = vshrl.u32 %v656, 7
      %659 = vset.pattern.permute.xlu0 %v657
      %660 = vperm.xlu0 %659, %v655
      %v661 = vpop.permute.xlu0 %660
      %v662 = vlaneseq
      %v663 = vshrl.u32 %v662, 7
      %v664 = vadd.s32 %v663, 8
      %665 = vset.pattern.permute.xlu0 %v664
      %666 = vperm.xlu0 %665, %v655
      %v667 = vpop.permute.xlu0 %666
      %v668 = vperm.slane %v602, 5
      %v669 = vlaneseq
      %v670 = vshrl.u32 %v669, 7
      %672 = vset.pattern.permute.xlu0 %v670
      %673 = vperm.xlu0 %672, %v668
      %v674 = vpop.permute.xlu0 %673
      %v675 = vlaneseq
      %v676 = vshrl.u32 %v675, 7
      %v677 = vadd.s32 %v676, 8
      %678 = vset.pattern.permute.xlu0 %v677
      %679 = vperm.xlu0 %678, %v668
      %v680 = vpop.permute.xlu0 %679
      %v681 = vperm.slane %v602, 6
      %v682 = vlaneseq
      %v683 = vshrl.u32 %v682, 7
      %685 = vset.pattern.permute.xlu0 %v683
      %686 = vperm.xlu0 %685, %v681
      %v687 = vpop.permute.xlu0 %686
      %v688 = vlaneseq
      %v689 = vshrl.u32 %v688, 7
      %v690 = vadd.s32 %v689, 8
      %691 = vset.pattern.permute.xlu0 %v690
      %692 = vperm.xlu0 %691, %v681
      %v693 = vpop.permute.xlu0 %692
      %v694 = vperm.slane %v602, 7
      %v695 = vlaneseq
      %v696 = vshrl.u32 %v695, 7
      %698 = vset.pattern.permute.xlu0 %v696
      %699 = vperm.xlu0 %698, %v694
      %v700 = vpop.permute.xlu0 %699
      %v701 = vlaneseq
      %v702 = vshrl.u32 %v701, 7
      %v703 = vadd.s32 %v702, 8
      %704 = vset.pattern.permute.xlu0 %v703
      %705 = vperm.xlu0 %704, %v694
      %v706 = vpop.permute.xlu0 %705
      %v707 = vperm.slane %v492, 0
      %v708 = vmul.f32 %v707, %v480
      %v709 = vmul.f32 %v707, %v481
      %v710 = vmul.f32 %v708, 1.442695
      %v711 = vpow.pop %v710
      %v712 = vmul.f32 %v709, 1.442695
      %v713 = vpow.pop %v712
      %v714 = vperm.slane %v494, 0
      %v715 = vmul.f32 %v714, %v503
      %v716 = vmul.f32 %v714, %v509
      %v717 = vmul.f32 %v711, %v488
      %v718 = vmul.f32 %v713, %v489
      %v719 = vadd.f32 %v717, %v715
      %v720 = vadd.f32 %v718, %v716
      %v721 = vmul.f32 %v719, %v609
      %v722 = vmul.f32 %v720, %v615
      %v723 = vsel %vm295, %v721, 0.0
      %v724 = vsel %vm295, %v722, 0.0
      %v725 = vadd.f32 %v723, %v724
      %v726 = vrot.slane %v725, 4
      %v727 = vadd.f32 %v725, %v726
      %v728 = vrot.slane %v727, 2
      %v729 = vadd.f32 %v727, %v728
      %v730 = vrot.slane %v729, 1
      %v731 = vadd.f32 %v729, %v730
      %s732 = scalar_lea.vmem [#allocation7], %s490
      %vm733 = vcmask 253952
      %734 = vst.msk [vmem:[%s732] sm:$0x1] %vm733, %v731
      %v735 = vperm.slane %v492, 1
      %v736 = vmul.f32 %v735, %v480
      %v737 = vmul.f32 %v735, %v481
      %v738 = vmul.f32 %v736, 1.442695
      %v739 = vpow.pop %v738
      %v740 = vmul.f32 %v737, 1.442695
      %v741 = vpow.pop %v740
      %v742 = vperm.slane %v494, 1
      %v743 = vmul.f32 %v742, %v516
      %v744 = vmul.f32 %v742, %v522
      %v745 = vmul.f32 %v739, %v719
      %v746 = vmul.f32 %v741, %v720
      %v747 = vadd.f32 %v745, %v743
      %v748 = vadd.f32 %v746, %v744
      %v749 = vmul.f32 %v747, %v622
      %v750 = vmul.f32 %v748, %v628
      %v751 = vsel %vm295, %v749, 0.0
      %v752 = vsel %vm295, %v750, 0.0
      %v753 = vadd.f32 %v751, %v752
      %v754 = vrot.slane %v753, 4
      %v755 = vadd.f32 %v753, %v754
      %v756 = vrot.slane %v755, 2
      %v757 = vadd.f32 %v755, %v756
      %v758 = vrot.slane %v757, 1
      %v759 = vadd.f32 %v757, %v758
      %s760 = sadd.s32 %s490, 1
      %s761 = scalar_lea.vmem [#allocation7], %s760
      %762 = vst.msk [vmem:[%s761] sm:$0x1] %vm733, %v759
      %v763 = vperm.slane %v492, 2
      %v764 = vmul.f32 %v763, %v480
      %v765 = vmul.f32 %v763, %v481
      %v766 = vmul.f32 %v764, 1.442695
      %v767 = vpow.pop %v766
      %v768 = vmul.f32 %v765, 1.442695
      %v769 = vpow.pop %v768
      %v770 = vperm.slane %v494, 2
      %v771 = vmul.f32 %v770, %v529
      %v772 = vmul.f32 %v770, %v535
      %v773 = vmul.f32 %v767, %v747
      %v774 = vmul.f32 %v769, %v748
      %v775 = vadd.f32 %v773, %v771
      %v776 = vadd.f32 %v774, %v772
      %v777 = vmul.f32 %v775, %v635
      %v778 = vmul.f32 %v776, %v641
      %v779 = vsel %vm295, %v777, 0.0
      %v780 = vsel %vm295, %v778, 0.0
      %v781 = vadd.f32 %v779, %v780
      %v782 = vrot.slane %v781, 4
      %v783 = vadd.f32 %v781, %v782
      %v784 = vrot.slane %v783, 2
      %v785 = vadd.f32 %v783, %v784
      %v786 = vrot.slane %v785, 1
      %v787 = vadd.f32 %v785, %v786
      %s788 = sadd.s32 %s490, 2
      %s789 = scalar_lea.vmem [#allocation7], %s788
      %790 = vst.msk [vmem:[%s789] sm:$0x1] %vm733, %v787
      %v791 = vperm.slane %v492, 3
      %v792 = vmul.f32 %v791, %v480
      %v793 = vmul.f32 %v791, %v481
      %v794 = vmul.f32 %v792, 1.442695
      %v795 = vpow.pop %v794
      %v796 = vmul.f32 %v793, 1.442695
      %v797 = vpow.pop %v796
      %v798 = vperm.slane %v494, 3
      %v799 = vmul.f32 %v798, %v542
      %v800 = vmul.f32 %v798, %v548
      %v801 = vmul.f32 %v795, %v775
      %v802 = vmul.f32 %v797, %v776
      %v803 = vadd.f32 %v801, %v799
      %v804 = vadd.f32 %v802, %v800
      %v805 = vmul.f32 %v803, %v648
      %v806 = vmul.f32 %v804, %v654
      %v807 = vsel %vm295, %v805, 0.0
      %v808 = vsel %vm295, %v806, 0.0
      %v809 = vadd.f32 %v807, %v808
      %v810 = vrot.slane %v809, 4
      %v811 = vadd.f32 %v809, %v810
      %v812 = vrot.slane %v811, 2
      %v813 = vadd.f32 %v811, %v812
      %v814 = vrot.slane %v813, 1
      %v815 = vadd.f32 %v813, %v814
      %s816 = sadd.s32 %s490, 3
      %s817 = scalar_lea.vmem [#allocation7], %s816
      %818 = vst.msk [vmem:[%s817] sm:$0x1] %vm733, %v815
      %v819 = vperm.slane %v492, 4
      %v820 = vmul.f32 %v819, %v480
      %v821 = vmul.f32 %v819, %v481
      %v822 = vmul.f32 %v820, 1.442695
      %v823 = vpow.pop %v822
      %v824 = vmul.f32 %v821, 1.442695
      %v825 = vpow.pop %v824
      %v826 = vperm.slane %v494, 4
      %v827 = vmul.f32 %v826, %v555
      %v828 = vmul.f32 %v826, %v561
      %v829 = vmul.f32 %v823, %v803
      %v830 = vmul.f32 %v825, %v804
      %v831 = vadd.f32 %v829, %v827
      %v832 = vadd.f32 %v830, %v828
      %v833 = vmul.f32 %v831, %v661
      %v834 = vmul.f32 %v832, %v667
      %v835 = vsel %vm295, %v833, 0.0
      %v836 = vsel %vm295, %v834, 0.0
      %v837 = vadd.f32 %v835, %v836
      %v838 = vrot.slane %v837, 4
      %v839 = vadd.f32 %v837, %v838
      %v840 = vrot.slane %v839, 2
      %v841 = vadd.f32 %v839, %v840
      %v842 = vrot.slane %v841, 1
      %v843 = vadd.f32 %v841, %v842
      %s844 = sadd.s32 %s490, 4
      %s845 = scalar_lea.vmem [#allocation7], %s844
      %846 = vst.msk [vmem:[%s845] sm:$0x1] %vm733, %v843
      %v847 = vperm.slane %v492, 5
      %v848 = vmul.f32 %v847, %v480
      %v849 = vmul.f32 %v847, %v481
      %v850 = vmul.f32 %v848, 1.442695
      %v851 = vpow.pop %v850
      %v852 = vmul.f32 %v849, 1.442695
      %v853 = vpow.pop %v852
      %v854 = vperm.slane %v494, 5
      %v855 = vmul.f32 %v854, %v568
      %v856 = vmul.f32 %v854, %v574
      %v857 = vmul.f32 %v851, %v831
      %v858 = vmul.f32 %v853, %v832
      %v859 = vadd.f32 %v857, %v855
      %v860 = vadd.f32 %v858, %v856
      %v861 = vmul.f32 %v859, %v674
      %v862 = vmul.f32 %v860, %v680
      %v863 = vsel %vm295, %v861, 0.0
      %v864 = vsel %vm295, %v862, 0.0
      %v865 = vadd.f32 %v863, %v864
      %v866 = vrot.slane %v865, 4
      %v867 = vadd.f32 %v865, %v866
      %v868 = vrot.slane %v867, 2
      %v869 = vadd.f32 %v867, %v868
      %v870 = vrot.slane %v869, 1
      %v871 = vadd.f32 %v869, %v870
      %s872 = sadd.s32 %s490, 5
      %s873 = scalar_lea.vmem [#allocation7], %s872
      %874 = vst.msk [vmem:[%s873] sm:$0x1] %vm733, %v871
      %v875 = vperm.slane %v492, 6
      %v876 = vmul.f32 %v875, %v480
      %v877 = vmul.f32 %v875, %v481
      %v878 = vmul.f32 %v876, 1.442695
      %v879 = vpow.pop %v878
      %v880 = vmul.f32 %v877, 1.442695
      %v881 = vpow.pop %v880
      %v882 = vperm.slane %v494, 6
      %v883 = vmul.f32 %v882, %v581
      %v884 = vmul.f32 %v882, %v587
      %v885 = vmul.f32 %v879, %v859
      %v886 = vmul.f32 %v881, %v860
      %v887 = vadd.f32 %v885, %v883
      %v888 = vadd.f32 %v886, %v884
      %v889 = vmul.f32 %v887, %v687
      %v890 = vmul.f32 %v888, %v693
      %v891 = vsel %vm295, %v889, 0.0
      %v892 = vsel %vm295, %v890, 0.0
      %v893 = vadd.f32 %v891, %v892
      %v894 = vrot.slane %v893, 4
      %v895 = vadd.f32 %v893, %v894
      %v896 = vrot.slane %v895, 2
      %v897 = vadd.f32 %v895, %v896
      %v898 = vrot.slane %v897, 1
      %v899 = vadd.f32 %v897, %v898
      %s900 = sadd.s32 %s490, 6
      %s901 = scalar_lea.vmem [#allocation7], %s900
      %902 = vst.msk [vmem:[%s901] sm:$0x1] %vm733, %v899
      %v903 = vperm.slane %v492, 7
      %v904 = vmul.f32 %v903, %v480
      %v905 = vmul.f32 %v903, %v481
      %v906 = vmul.f32 %v904, 1.442695
      %v907 = vpow.pop %v906
      %v908 = vmul.f32 %v905, 1.442695
      %v909 = vpow.pop %v908
      %v910 = vperm.slane %v494, 7
      %v911 = vmul.f32 %v910, %v594
      %v912 = vmul.f32 %v910, %v600
      %v913 = vmul.f32 %v907, %v887
      %v914 = vmul.f32 %v909, %v888
      %v915 = vadd.f32 %v913, %v911
      %v916 = vadd.f32 %v914, %v912
      %v917 = vmul.f32 %v915, %v700
      %v918 = vmul.f32 %v916, %v706
      %v919 = vsel %vm295, %v917, 0.0
      %v920 = vsel %vm295, %v918, 0.0
      %v921 = vadd.f32 %v919, %v920
      %v922 = vrot.slane %v921, 4
      %v923 = vadd.f32 %v921, %v922
      %v924 = vrot.slane %v923, 2
      %v925 = vadd.f32 %v923, %v924
      %v926 = vrot.slane %v925, 1
      %v927 = vadd.f32 %v925, %v926
      %s928 = sadd.s32 %s490, 7
      %s929 = scalar_lea.vmem [#allocation7], %s928
      %930 = vst.msk [vmem:[%s929] sm:$0x1] %vm733, %v927
    $region42: #{tpu_custom_call.1} parent=1 // loop_footer
      %s487 = sadd.s32 1, %s483
    $region43: #{tpu_custom_call.1} parent=1 // loop_footer_branch
      %482 = sbr.rel target = $region39
    $region44: #{tpu_custom_call.1} parent=1 // loop_exit
      _
    loop: start=0, step=1, limit=2
    $region45: #{tpu_custom_call.1} parent=1 // loop_pre_header
      _
    $region46: #{tpu_custom_call.1} parent=1 // loop_header
      %s932 = sphi 0, %s936
      %p933 = scmp.ge.s32.totalorder %s932, 2
      %v937 = vphi 0.0, %v1365
      %v938 = vphi 0.0, %v1366
    $region47: #{tpu_custom_call.1} parent=1 // loop_header_branch
      %935 = sbr.rel (%p933) target = $region51
    $region48: #{tpu_custom_call.1} parent=1 // loop_body
      %s939 = smul.u32 %s932, 8
      %s940 = sadd.s32 %s939, 16
      %s941 = scalar_lea.vmem [#allocation3], %s940
      %v942 = vld [vmem:[%s941] sm:$0xff]
      %s943 = scalar_lea.vmem [#allocation4], %s940
      %v944 = vld [vmem:[%s943] sm:$0xff]
      %s945 = scalar_lea.vmem [#allocation5], %s940
      %v946 = vld [vmem:[%s945] sm:$0xff]
      %v947 = vperm.slane %v946, 0
      %v948 = vlaneseq
      %v949 = vshrl.u32 %v948, 7
      %951 = vset.pattern.permute.xlu0 %v949
      %952 = vperm.xlu0 %951, %v947
      %v953 = vpop.permute.xlu0 %952
      %v954 = vlaneseq
      %v955 = vshrl.u32 %v954, 7
      %v956 = vadd.s32 %v955, 8
      %957 = vset.pattern.permute.xlu0 %v956
      %958 = vperm.xlu0 %957, %v947
      %v959 = vpop.permute.xlu0 %958
      %v960 = vperm.slane %v946, 1
      %v961 = vlaneseq
      %v962 = vshrl.u32 %v961, 7
      %964 = vset.pattern.permute.xlu0 %v962
      %965 = vperm.xlu0 %964, %v960
      %v966 = vpop.permute.xlu0 %965
      %v967 = vlaneseq
      %v968 = vshrl.u32 %v967, 7
      %v969 = vadd.s32 %v968, 8
      %970 = vset.pattern.permute.xlu0 %v969
      %971 = vperm.xlu0 %970, %v960
      %v972 = vpop.permute.xlu0 %971
      %v973 = vperm.slane %v946, 2
      %v974 = vlaneseq
      %v975 = vshrl.u32 %v974, 7
      %977 = vset.pattern.permute.xlu0 %v975
      %978 = vperm.xlu0 %977, %v973
      %v979 = vpop.permute.xlu0 %978
      %v980 = vlaneseq
      %v981 = vshrl.u32 %v980, 7
      %v982 = vadd.s32 %v981, 8
      %983 = vset.pattern.permute.xlu0 %v982
      %984 = vperm.xlu0 %983, %v973
      %v985 = vpop.permute.xlu0 %984
      %v986 = vperm.slane %v946, 3
      %v987 = vlaneseq
      %v988 = vshrl.u32 %v987, 7
      %990 = vset.pattern.permute.xlu0 %v988
      %991 = vperm.xlu0 %990, %v986
      %v992 = vpop.permute.xlu0 %991
      %v993 = vlaneseq
      %v994 = vshrl.u32 %v993, 7
      %v995 = vadd.s32 %v994, 8
      %996 = vset.pattern.permute.xlu0 %v995
      %997 = vperm.xlu0 %996, %v986
      %v998 = vpop.permute.xlu0 %997
      %v999 = vperm.slane %v946, 4
      %v1000 = vlaneseq
      %v1001 = vshrl.u32 %v1000, 7
      %1003 = vset.pattern.permute.xlu0 %v1001
      %1004 = vperm.xlu0 %1003, %v999
      %v1005 = vpop.permute.xlu0 %1004
      %v1006 = vlaneseq
      %v1007 = vshrl.u32 %v1006, 7
      %v1008 = vadd.s32 %v1007, 8
      %1009 = vset.pattern.permute.xlu0 %v1008
      %1010 = vperm.xlu0 %1009, %v999
      %v1011 = vpop.permute.xlu0 %1010
      %v1012 = vperm.slane %v946, 5
      %v1013 = vlaneseq
      %v1014 = vshrl.u32 %v1013, 7
      %1016 = vset.pattern.permute.xlu0 %v1014
      %1017 = vperm.xlu0 %1016, %v1012
      %v1018 = vpop.permute.xlu0 %1017
      %v1019 = vlaneseq
      %v1020 = vshrl.u32 %v1019, 7
      %v1021 = vadd.s32 %v1020, 8
      %1022 = vset.pattern.permute.xlu0 %v1021
      %1023 = vperm.xlu0 %1022, %v1012
      %v1024 = vpop.permute.xlu0 %1023
      %v1025 = vperm.slane %v946, 6
      %v1026 = vlaneseq
      %v1027 = vshrl.u32 %v1026, 7
      %1029 = vset.pattern.permute.xlu0 %v1027
      %1030 = vperm.xlu0 %1029, %v1025
      %v1031 = vpop.permute.xlu0 %1030
      %v1032 = vlaneseq
      %v1033 = vshrl.u32 %v1032, 7
      %v1034 = vadd.s32 %v1033, 8
      %1035 = vset.pattern.permute.xlu0 %v1034
      %1036 = vperm.xlu0 %1035, %v1025
      %v1037 = vpop.permute.xlu0 %1036
      %v1038 = vperm.slane %v946, 7
      %v1039 = vlaneseq
      %v1040 = vshrl.u32 %v1039, 7
      %1042 = vset.pattern.permute.xlu0 %v1040
      %1043 = vperm.xlu0 %1042, %v1038
      %v1044 = vpop.permute.xlu0 %1043
      %v1045 = vlaneseq
      %v1046 = vshrl.u32 %v1045, 7
      %v1047 = vadd.s32 %v1046, 8
      %1048 = vset.pattern.permute.xlu0 %v1047
      %1049 = vperm.xlu0 %1048, %v1038
      %v1050 = vpop.permute.xlu0 %1049
      %s1051 = scalar_lea.vmem [#allocation6], %s940
      %v1052 = vld [vmem:[%s1051] sm:$0xff]
      %v1053 = vperm.slane %v1052, 0
      %v1054 = vlaneseq
      %v1055 = vshrl.u32 %v1054, 7
      %1057 = vset.pattern.permute.xlu0 %v1055
      %1058 = vperm.xlu0 %1057, %v1053
      %v1059 = vpop.permute.xlu0 %1058
      %v1060 = vlaneseq
      %v1061 = vshrl.u32 %v1060, 7
      %v1062 = vadd.s32 %v1061, 8
      %1063 = vset.pattern.permute.xlu0 %v1062
      %1064 = vperm.xlu0 %1063, %v1053
      %v1065 = vpop.permute.xlu0 %1064
      %v1066 = vperm.slane %v1052, 1
      %v1067 = vlaneseq
      %v1068 = vshrl.u32 %v1067, 7
      %1070 = vset.pattern.permute.xlu0 %v1068
      %1071 = vperm.xlu0 %1070, %v1066
      %v1072 = vpop.permute.xlu0 %1071
      %v1073 = vlaneseq
      %v1074 = vshrl.u32 %v1073, 7
      %v1075 = vadd.s32 %v1074, 8
      %1076 = vset.pattern.permute.xlu0 %v1075
      %1077 = vperm.xlu0 %1076, %v1066
      %v1078 = vpop.permute.xlu0 %1077
      %v1079 = vperm.slane %v1052, 2
      %v1080 = vlaneseq
      %v1081 = vshrl.u32 %v1080, 7
      %1083 = vset.pattern.permute.xlu0 %v1081
      %1084 = vperm.xlu0 %1083, %v1079
      %v1085 = vpop.permute.xlu0 %1084
      %v1086 = vlaneseq
      %v1087 = vshrl.u32 %v1086, 7
      %v1088 = vadd.s32 %v1087, 8
      %1089 = vset.pattern.permute.xlu0 %v1088
      %1090 = vperm.xlu0 %1089, %v1079
      %v1091 = vpop.permute.xlu0 %1090
      %v1092 = vperm.slane %v1052, 3
      %v1093 = vlaneseq
      %v1094 = vshrl.u32 %v1093, 7
      %1096 = vset.pattern.permute.xlu0 %v1094
      %1097 = vperm.xlu0 %1096, %v1092
      %v1098 = vpop.permute.xlu0 %1097
      %v1099 = vlaneseq
      %v1100 = vshrl.u32 %v1099, 7
      %v1101 = vadd.s32 %v1100, 8
      %1102 = vset.pattern.permute.xlu0 %v1101
      %1103 = vperm.xlu0 %1102, %v1092
      %v1104 = vpop.permute.xlu0 %1103
      %v1105 = vperm.slane %v1052, 4
      %v1106 = vlaneseq
      %v1107 = vshrl.u32 %v1106, 7
      %1109 = vset.pattern.permute.xlu0 %v1107
      %1110 = vperm.xlu0 %1109, %v1105
      %v1111 = vpop.permute.xlu0 %1110
      %v1112 = vlaneseq
      %v1113 = vshrl.u32 %v1112, 7
      %v1114 = vadd.s32 %v1113, 8
      %1115 = vset.pattern.permute.xlu0 %v1114
      %1116 = vperm.xlu0 %1115, %v1105
      %v1117 = vpop.permute.xlu0 %1116
      %v1118 = vperm.slane %v1052, 5
      %v1119 = vlaneseq
      %v1120 = vshrl.u32 %v1119, 7
      %1122 = vset.pattern.permute.xlu0 %v1120
      %1123 = vperm.xlu0 %1122, %v1118
      %v1124 = vpop.permute.xlu0 %1123
      %v1125 = vlaneseq
      %v1126 = vshrl.u32 %v1125, 7
      %v1127 = vadd.s32 %v1126, 8
      %1128 = vset.pattern.permute.xlu0 %v1127
      %1129 = vperm.xlu0 %1128, %v1118
      %v1130 = vpop.permute.xlu0 %1129
      %v1131 = vperm.slane %v1052, 6
      %v1132 = vlaneseq
      %v1133 = vshrl.u32 %v1132, 7
      %1135 = vset.pattern.permute.xlu0 %v1133
      %1136 = vperm.xlu0 %1135, %v1131
      %v1137 = vpop.permute.xlu0 %1136
      %v1138 = vlaneseq
      %v1139 = vshrl.u32 %v1138, 7
      %v1140 = vadd.s32 %v1139, 8
      %1141 = vset.pattern.permute.xlu0 %v1140
      %1142 = vperm.xlu0 %1141, %v1131
      %v1143 = vpop.permute.xlu0 %1142
      %v1144 = vperm.slane %v1052, 7
      %v1145 = vlaneseq
      %v1146 = vshrl.u32 %v1145, 7
      %1148 = vset.pattern.permute.xlu0 %v1146
      %1149 = vperm.xlu0 %1148, %v1144
      %v1150 = vpop.permute.xlu0 %1149
      %v1151 = vlaneseq
      %v1152 = vshrl.u32 %v1151, 7
      %v1153 = vadd.s32 %v1152, 8
      %1154 = vset.pattern.permute.xlu0 %v1153
      %1155 = vperm.xlu0 %1154, %v1144
      %v1156 = vpop.permute.xlu0 %1155
      %v1157 = vperm.slane %v942, 0
      %v1158 = vmul.f32 %v1157, %v480
      %v1159 = vmul.f32 %v1157, %v481
      %v1160 = vmul.f32 %v1158, 1.442695
      %v1161 = vpow.pop %v1160
      %v1162 = vmul.f32 %v1159, 1.442695
      %v1163 = vpow.pop %v1162
      %v1164 = vperm.slane %v944, 0
      %v1165 = vmul.f32 %v1164, %v953
      %v1166 = vmul.f32 %v1164, %v959
      %v1167 = vmul.f32 %v1161, %v937
      %v1168 = vmul.f32 %v1163, %v938
      %v1169 = vadd.f32 %v1167, %v1165
      %v1170 = vadd.f32 %v1168, %v1166
      %v1171 = vmul.f32 %v1169, %v1059
      %v1172 = vmul.f32 %v1170, %v1065
      %v1173 = vsel %vm295, %v1171, 0.0
      %v1174 = vsel %vm295, %v1172, 0.0
      %v1175 = vadd.f32 %v1173, %v1174
      %v1176 = vrot.slane %v1175, 4
      %v1177 = vadd.f32 %v1175, %v1176
      %v1178 = vrot.slane %v1177, 2
      %v1179 = vadd.f32 %v1177, %v1178
      %v1180 = vrot.slane %v1179, 1
      %v1181 = vadd.f32 %v1179, %v1180
      %s1182 = scalar_lea.vmem [#allocation7], %s940
      %vm1183 = vcmask 253952
      %1184 = vst.msk [vmem:[%s1182] sm:$0x1] %vm1183, %v1181
      %v1185 = vperm.slane %v942, 1
      %v1186 = vmul.f32 %v1185, %v480
      %v1187 = vmul.f32 %v1185, %v481
      %v1188 = vmul.f32 %v1186, 1.442695
      %v1189 = vpow.pop %v1188
      %v1190 = vmul.f32 %v1187, 1.442695
      %v1191 = vpow.pop %v1190
      %v1192 = vperm.slane %v944, 1
      %v1193 = vmul.f32 %v1192, %v966
      %v1194 = vmul.f32 %v1192, %v972
      %v1195 = vmul.f32 %v1189, %v1169
      %v1196 = vmul.f32 %v1191, %v1170
      %v1197 = vadd.f32 %v1195, %v1193
      %v1198 = vadd.f32 %v1196, %v1194
      %v1199 = vmul.f32 %v1197, %v1072
      %v1200 = vmul.f32 %v1198, %v1078
      %v1201 = vsel %vm295, %v1199, 0.0
      %v1202 = vsel %vm295, %v1200, 0.0
      %v1203 = vadd.f32 %v1201, %v1202
      %v1204 = vrot.slane %v1203, 4
      %v1205 = vadd.f32 %v1203, %v1204
      %v1206 = vrot.slane %v1205, 2
      %v1207 = vadd.f32 %v1205, %v1206
      %v1208 = vrot.slane %v1207, 1
      %v1209 = vadd.f32 %v1207, %v1208
      %s1210 = sadd.s32 %s940, 1
      %s1211 = scalar_lea.vmem [#allocation7], %s1210
      %1212 = vst.msk [vmem:[%s1211] sm:$0x1] %vm1183, %v1209
      %v1213 = vperm.slane %v942, 2
      %v1214 = vmul.f32 %v1213, %v480
      %v1215 = vmul.f32 %v1213, %v481
      %v1216 = vmul.f32 %v1214, 1.442695
      %v1217 = vpow.pop %v1216
      %v1218 = vmul.f32 %v1215, 1.442695
      %v1219 = vpow.pop %v1218
      %v1220 = vperm.slane %v944, 2
      %v1221 = vmul.f32 %v1220, %v979
      %v1222 = vmul.f32 %v1220, %v985
      %v1223 = vmul.f32 %v1217, %v1197
      %v1224 = vmul.f32 %v1219, %v1198
      %v1225 = vadd.f32 %v1223, %v1221
      %v1226 = vadd.f32 %v1224, %v1222
      %v1227 = vmul.f32 %v1225, %v1085
      %v1228 = vmul.f32 %v1226, %v1091
      %v1229 = vsel %vm295, %v1227, 0.0
      %v1230 = vsel %vm295, %v1228, 0.0
      %v1231 = vadd.f32 %v1229, %v1230
      %v1232 = vrot.slane %v1231, 4
      %v1233 = vadd.f32 %v1231, %v1232
      %v1234 = vrot.slane %v1233, 2
      %v1235 = vadd.f32 %v1233, %v1234
      %v1236 = vrot.slane %v1235, 1
      %v1237 = vadd.f32 %v1235, %v1236
      %s1238 = sadd.s32 %s940, 2
      %s1239 = scalar_lea.vmem [#allocation7], %s1238
      %1240 = vst.msk [vmem:[%s1239] sm:$0x1] %vm1183, %v1237
      %v1241 = vperm.slane %v942, 3
      %v1242 = vmul.f32 %v1241, %v480
      %v1243 = vmul.f32 %v1241, %v481
      %v1244 = vmul.f32 %v1242, 1.442695
      %v1245 = vpow.pop %v1244
      %v1246 = vmul.f32 %v1243, 1.442695
      %v1247 = vpow.pop %v1246
      %v1248 = vperm.slane %v944, 3
      %v1249 = vmul.f32 %v1248, %v992
      %v1250 = vmul.f32 %v1248, %v998
      %v1251 = vmul.f32 %v1245, %v1225
      %v1252 = vmul.f32 %v1247, %v1226
      %v1253 = vadd.f32 %v1251, %v1249
      %v1254 = vadd.f32 %v1252, %v1250
      %v1255 = vmul.f32 %v1253, %v1098
      %v1256 = vmul.f32 %v1254, %v1104
      %v1257 = vsel %vm295, %v1255, 0.0
      %v1258 = vsel %vm295, %v1256, 0.0
      %v1259 = vadd.f32 %v1257, %v1258
      %v1260 = vrot.slane %v1259, 4
      %v1261 = vadd.f32 %v1259, %v1260
      %v1262 = vrot.slane %v1261, 2
      %v1263 = vadd.f32 %v1261, %v1262
      %v1264 = vrot.slane %v1263, 1
      %v1265 = vadd.f32 %v1263, %v1264
      %s1266 = sadd.s32 %s940, 3
      %s1267 = scalar_lea.vmem [#allocation7], %s1266
      %1268 = vst.msk [vmem:[%s1267] sm:$0x1] %vm1183, %v1265
      %v1269 = vperm.slane %v942, 4
      %v1270 = vmul.f32 %v1269, %v480
      %v1271 = vmul.f32 %v1269, %v481
      %v1272 = vmul.f32 %v1270, 1.442695
      %v1273 = vpow.pop %v1272
      %v1274 = vmul.f32 %v1271, 1.442695
      %v1275 = vpow.pop %v1274
      %v1276 = vperm.slane %v944, 4
      %v1277 = vmul.f32 %v1276, %v1005
      %v1278 = vmul.f32 %v1276, %v1011
      %v1279 = vmul.f32 %v1273, %v1253
      %v1280 = vmul.f32 %v1275, %v1254
      %v1281 = vadd.f32 %v1279, %v1277
      %v1282 = vadd.f32 %v1280, %v1278
      %v1283 = vmul.f32 %v1281, %v1111
      %v1284 = vmul.f32 %v1282, %v1117
      %v1285 = vsel %vm295, %v1283, 0.0
      %v1286 = vsel %vm295, %v1284, 0.0
      %v1287 = vadd.f32 %v1285, %v1286
      %v1288 = vrot.slane %v1287, 4
      %v1289 = vadd.f32 %v1287, %v1288
      %v1290 = vrot.slane %v1289, 2
      %v1291 = vadd.f32 %v1289, %v1290
      %v1292 = vrot.slane %v1291, 1
      %v1293 = vadd.f32 %v1291, %v1292
      %s1294 = sadd.s32 %s940, 4
      %s1295 = scalar_lea.vmem [#allocation7], %s1294
      %1296 = vst.msk [vmem:[%s1295] sm:$0x1] %vm1183, %v1293
      %v1297 = vperm.slane %v942, 5
      %v1298 = vmul.f32 %v1297, %v480
      %v1299 = vmul.f32 %v1297, %v481
      %v1300 = vmul.f32 %v1298, 1.442695
      %v1301 = vpow.pop %v1300
      %v1302 = vmul.f32 %v1299, 1.442695
      %v1303 = vpow.pop %v1302
      %v1304 = vperm.slane %v944, 5
      %v1305 = vmul.f32 %v1304, %v1018
      %v1306 = vmul.f32 %v1304, %v1024
      %v1307 = vmul.f32 %v1301, %v1281
      %v1308 = vmul.f32 %v1303, %v1282
      %v1309 = vadd.f32 %v1307, %v1305
      %v1310 = vadd.f32 %v1308, %v1306
      %v1311 = vmul.f32 %v1309, %v1124
      %v1312 = vmul.f32 %v1310, %v1130
      %v1313 = vsel %vm295, %v1311, 0.0
      %v1314 = vsel %vm295, %v1312, 0.0
      %v1315 = vadd.f32 %v1313, %v1314
      %v1316 = vrot.slane %v1315, 4
      %v1317 = vadd.f32 %v1315, %v1316
      %v1318 = vrot.slane %v1317, 2
      %v1319 = vadd.f32 %v1317, %v1318
      %v1320 = vrot.slane %v1319, 1
      %v1321 = vadd.f32 %v1319, %v1320
      %s1322 = sadd.s32 %s940, 5
      %s1323 = scalar_lea.vmem [#allocation7], %s1322
      %1324 = vst.msk [vmem:[%s1323] sm:$0x1] %vm1183, %v1321
      %v1325 = vperm.slane %v942, 6
      %v1326 = vmul.f32 %v1325, %v480
      %v1327 = vmul.f32 %v1325, %v481
      %v1328 = vmul.f32 %v1326, 1.442695
      %v1329 = vpow.pop %v1328
      %v1330 = vmul.f32 %v1327, 1.442695
      %v1331 = vpow.pop %v1330
      %v1332 = vperm.slane %v944, 6
      %v1333 = vmul.f32 %v1332, %v1031
      %v1334 = vmul.f32 %v1332, %v1037
      %v1335 = vmul.f32 %v1329, %v1309
      %v1336 = vmul.f32 %v1331, %v1310
      %v1337 = vadd.f32 %v1335, %v1333
      %v1338 = vadd.f32 %v1336, %v1334
      %v1339 = vmul.f32 %v1337, %v1137
      %v1340 = vmul.f32 %v1338, %v1143
      %v1341 = vsel %vm295, %v1339, 0.0
      %v1342 = vsel %vm295, %v1340, 0.0
      %v1343 = vadd.f32 %v1341, %v1342
      %v1344 = vrot.slane %v1343, 4
      %v1345 = vadd.f32 %v1343, %v1344
      %v1346 = vrot.slane %v1345, 2
      %v1347 = vadd.f32 %v1345, %v1346
      %v1348 = vrot.slane %v1347, 1
      %v1349 = vadd.f32 %v1347, %v1348
      %s1350 = sadd.s32 %s940, 6
      %s1351 = scalar_lea.vmem [#allocation7], %s1350
      %1352 = vst.msk [vmem:[%s1351] sm:$0x1] %vm1183, %v1349
      %v1353 = vperm.slane %v942, 7
      %v1354 = vmul.f32 %v1353, %v480
      %v1355 = vmul.f32 %v1353, %v481
      %v1356 = vmul.f32 %v1354, 1.442695
      %v1357 = vpow.pop %v1356
      %v1358 = vmul.f32 %v1355, 1.442695
      %v1359 = vpow.pop %v1358
      %v1360 = vperm.slane %v944, 7
      %v1361 = vmul.f32 %v1360, %v1044
      %v1362 = vmul.f32 %v1360, %v1050
      %v1363 = vmul.f32 %v1357, %v1337
      %v1364 = vmul.f32 %v1359, %v1338
      %v1365 = vadd.f32 %v1363, %v1361
      %v1366 = vadd.f32 %v1364, %v1362
      %v1367 = vmul.f32 %v1365, %v1150
      %v1368 = vmul.f32 %v1366, %v1156
      %v1369 = vsel %vm295, %v1367, 0.0
      %v1370 = vsel %vm295, %v1368, 0.0
      %v1371 = vadd.f32 %v1369, %v1370
      %v1372 = vrot.slane %v1371, 4
      %v1373 = vadd.f32 %v1371, %v1372
      %v1374 = vrot.slane %v1373, 2
      %v1375 = vadd.f32 %v1373, %v1374
      %v1376 = vrot.slane %v1375, 1
      %v1377 = vadd.f32 %v1375, %v1376
      %s1378 = sadd.s32 %s940, 7
      %s1379 = scalar_lea.vmem [#allocation7], %s1378
      %1380 = vst.msk [vmem:[%s1379] sm:$0x1] %vm1183, %v1377
    $region49: #{tpu_custom_call.1} parent=1 // loop_footer
      %s936 = sadd.s32 1, %s932
    $region50: #{tpu_custom_call.1} parent=1 // loop_footer_branch
      %931 = sbr.rel target = $region46
    $region51: #{tpu_custom_call.1} parent=1 // loop_exit
      _
    %v1381 = vld [vmem:[#allocation7] sm:$0xff]
    %v1382 = vld [vmem:[#allocation7 + $0x8] sm:$0xff]
    %v1383 = vld [vmem:[#allocation7 + $0x10] sm:$0xff]
    %v1384 = vld [vmem:[#allocation7 + $0x18] sm:$0xff]
    %v1385 = vld [vmem:[%s7] sm:$0x1]
    %v1387 = vperm.slane %v1385, 0
    %v1389 = vmul.f32 %v1387, %v273
    %v1390 = vmul.f32 %v1387, %v274
    %v1391 = vmul.f32 %v1387, %v275
    %v1392 = vmul.f32 %v1387, %v276
    %v1393 = vadd.f32 %v1381, %v1389
    %v1394 = vadd.f32 %v1382, %v1390
    %v1395 = vadd.f32 %v1383, %v1391
    %v1396 = vadd.f32 %v1384, %v1392
    %v1397 = vld [vmem:[%s8] sm:$0xf]
    %v1398 = vld [vmem:[%s8 + $0x4] sm:$0xf]
    %v1399 = vld [vmem:[%s8 + $0x8] sm:$0xf]
    %v1400 = vld [vmem:[%s8 + $0xc] sm:$0xf]
    %v1401 = vld [vmem:[%s8 + $0x10] sm:$0xf]
    %v1402 = vld [vmem:[%s8 + $0x14] sm:$0xf]
    %v1403 = vld [vmem:[%s8 + $0x18] sm:$0xf]
    %v1404 = vld [vmem:[%s8 + $0x1c] sm:$0xf]
    %v1405 = vpack.c.bf16 %v1394, %v1393
    %v1406 = vpack.c.bf16 %v1396, %v1395
    %1409 = vrot.lane.b32.xlu0 %v277, 96
    %v1410 = vpop.permute.xlu0 %1409
    %1411 = vrot.lane.b32.xlu0 %v278, 96
    %v1412 = vpop.permute.xlu0 %1411
    %v1417 = vunpack.c.l.b16 %v1401
    %v1418 = vunpack.c.l.b16 %v1402
    %v1419 = vunpack.c.l.b16 %v1403
    %v1420 = vunpack.c.l.b16 %v1404
    %v1421 = vpack.c.b16 %v1418, %v1417
    %v1422 = vpack.c.b16 %v1420, %v1419
    %v1426 = vsel %vm295, %v1410, 0
    %v1429 = vsel %vm295, %v1412, 0
    %1431 = vmatpush.bf16.msra.mxu0 0
    %1432 = vmatpush.bf16.msra.mxu0 0
    %1433 = vmatpush.bf16.msra.mxu0 0
    %1434 = vmatpush.bf16.msra.mxu0 0
    %1435 = vmatpush.bf16.msra.mxu0 0
    %1436 = vmatpush.bf16.msra.mxu0 0
    %1437 = vmatpush.bf16.msra.mxu0 %v1422
    %1438 = vmatpush.bf16.msra.mxu0 %v1421
    %1439 = vmatmul.bf16.gmra.mxu0 %v1426
    %v1440 = vpop.f32.mrf.mxu0
    %v1441 = vadd.f32 0.0, %v1440
    %v1442 = vpop.f32.mrf.mxu0
    %v1443 = vadd.f32 0.0, %v1442
    %1444 = vmatmul.bf16.gmra.mxu0 %v1429
    %v1445 = vpop.f32.mrf.mxu0
    %v1446 = vadd.f32 0.0, %v1445
    %v1447 = vpop.f32.mrf.mxu0
    %v1448 = vadd.f32 0.0, %v1447
    %1449 = vdwg.mxu0
    %v1454 = vunpack.c.l.b16 %v1397
    %v1455 = vunpack.c.l.b16 %v1398
    %v1456 = vunpack.c.l.b16 %v1399
    %v1457 = vunpack.c.l.b16 %v1400
    %v1458 = vpack.c.b16 %v1455, %v1454
    %v1459 = vpack.c.b16 %v1457, %v1456
    %v1463 = vsel %vm295, %v1405, 0
    %v1466 = vsel %vm295, %v1406, 0
    %1468 = vmatpush.bf16.msra.mxu0 0
    %1469 = vmatpush.bf16.msra.mxu0 0
    %1470 = vmatpush.bf16.msra.mxu0 0
    %1471 = vmatpush.bf16.msra.mxu0 0
    %1472 = vmatpush.bf16.msra.mxu0 0
    %1473 = vmatpush.bf16.msra.mxu0 0
    %1474 = vmatpush.bf16.msra.mxu0 %v1459
    %1475 = vmatpush.bf16.msra.mxu0 %v1458
    %1476 = vmatmul.bf16.gmra.mxu0 %v1463
    %v1477 = vpop.f32.mrf.mxu0
    %v1478 = vadd.f32 %v1441, %v1477
    %v1479 = vpop.f32.mrf.mxu0
    %v1480 = vadd.f32 %v1443, %v1479
    %1481 = vmatmul.bf16.gmra.mxu0 %v1466
    %v1482 = vpop.f32.mrf.mxu0
    %v1483 = vadd.f32 %v1446, %v1482
    %v1484 = vpop.f32.mrf.mxu0
    %v1485 = vadd.f32 %v1448, %v1484
    %1486 = vdwg.mxu0
    %1487 = vst [vmem:[#allocation8] sm:$0xff] %v1478
    %1488 = vst [vmem:[#allocation8 + $0x8] sm:$0xff] %v1480
    %1489 = vst [vmem:[#allocation8 + $0x10] sm:$0xff] %v1483
    %1490 = vst [vmem:[#allocation8 + $0x18] sm:$0xff] %v1485
    // Predicated region
    $region52: #{tpu_custom_call.1} parent=1 // pred_check
      _
    $region53: #{tpu_custom_call.1} parent=1 // pred_check_branch
      %1492 = sbr.rel (0) target = $region55
    $region54: #{tpu_custom_call.1} parent=1 // pred_region
      %1494 = vsyncadd [#allocation9], 0
      %s1495 = sshll.u32 [#allocation8], 4
      %s1496 = int_to_ptr.vmem [resolvable:$true] %s1495
      %s1497 = sshll.u32 %s9, 4
      %s1498 = int_to_ptr.hbm [resolvable:$true] %s1497
      %1503 = dma.vmem_to_hbm [thread:$0]  %s1496, 512, %s1498, [#allocation9], 128, 128, 8
    $region55: #{tpu_custom_call.1} parent=1 // pred_fallthru
      _
    // Predicated region
    $region56: #{tpu_custom_call.1} parent=1 // pred_check
      _
    $region57: #{tpu_custom_call.1} parent=1 // pred_check_branch
      %1505 = sbr.rel (0) target = $region59
    $region58: #{tpu_custom_call.1} parent=1 // pred_region
      %1507 = dma.done [#allocation9], 512
    $region59: #{tpu_custom_call.1} parent=1 // pred_fallthru
      _
    %1508 = vsyncpa [#allocation9], 1

</llo_original>
